<compile_context>
chip_gen: v5e
topology: v5e:2x2
jax: 0.10.0
libtpu: 0.0.40
codegen_flags: <defaults>
</compile_context>

<pallas_src>
import functools
import math

import jax
import jax.numpy as jnp
from jax.experimental import pallas as pl
from jax.experimental.pallas import tpu as pltpu


# ----------------------------------------------------------------------------
# Pallas kernel: fused bilinear-upsample + 1x1 conv for one (sample, row tile)
# ----------------------------------------------------------------------------

def _upsample_conv_kernel(x_ref, r_ref, l_ref, w_ref, o_ref, th_ref,
                          *, c_in, h, t_ho, wo):
    # x_ref : (C_in*H, W)       bf16  whole low-res sample (NCHW rows flattened)
    # r_ref : (W, Wo)           bf16  horizontal interpolation matrix
    # l_ref : (t_ho, H)         bf16  vertical interpolation rows for this tile
    # w_ref : (C_out, C_in)     bf16  1x1 conv weight
    # o_ref : (C_out, t_ho*Wo)  f32   lane-dense output tile
    # th_ref: (C_in*H, Wo)      bf16  VMEM scratch: horizontal interp, computed
    #                                 once per sample and reused across row tiles
    r = pl.program_id(1)

    # 1) horizontal bilinear interpolation on the MXU -- only for the first
    #    row tile of each sample; later tiles reuse the cached result.
    @pl.when(r == 0)
    def _():
        th = jnp.dot(x_ref[...], r_ref[...],
                     preferred_element_type=jnp.float32)        # (C_in*H, Wo)
        th_ref[...] = th.astype(jnp.bfloat16)

    th = th_ref[...].reshape(c_in, h, wo)                       # free split
    # 2) vertical bilinear interpolation, batched over channels on the MXU
    lb = jnp.broadcast_to(l_ref[...][None, :, :], (c_in, t_ho, h))
    tv = jnp.einsum("cth,chv->ctv", lb, th,
                    preferred_element_type=jnp.float32)         # (C_in, t_ho, Wo)
    # 3) 1x1 convolution = channel mixing; lane-dense store (last dim t_ho*Wo)
    tv2 = tv.astype(jnp.bfloat16).reshape(c_in, t_ho * wo)
    o_ref[...] = jnp.dot(w_ref[...], tv2,
                         preferred_element_type=jnp.float32)    # (C_out, t_ho*Wo)


# ----------------------------------------------------------------------------
# Wrapper helpers
# ----------------------------------------------------------------------------

def _interp_matrix(in_size, out_size):
    """(out_size, in_size) bilinear weights, torch align_corners=False.

    Uses scale = in/out, which equals 1/scale_factor exactly for the integer
    upsample factors this module is used with."""
    scale = in_size / out_size
    src = (jnp.arange(out_size, dtype=jnp.float32) + 0.5) * scale - 0.5
    src = jnp.maximum(src, 0.0)                     # torch clamps negative src to 0
    i0 = jnp.minimum(jnp.floor(src).astype(jnp.int32), in_size - 1)
    i1 = jnp.minimum(i0 + 1, in_size - 1)
    w1 = src - i0.astype(jnp.float32)
    w0 = 1.0 - w1
    cols = jnp.arange(in_size, dtype=jnp.int32)[None, :]
    return (w0[:, None] * (i0[:, None] == cols)
            + w1[:, None] * (i1[:, None] == cols)).astype(jnp.float32)


def _pick_row_tile(ho, wo, c_in, c_out, h, vmem_budget=8 * 1024 * 1024):
    """Largest output-row tile that (a) keeps the out block legal
    (t*Wo % 128 == 0 or t == Ho, and t % 8 == 0 or t == Ho -> lane/sublane
    friendly) and (b) keeps per-step f32 intermediates well inside VMEM."""
    def footprint(t):
        return (4 * c_in * h * wo          # f32 horizontal result before cast
                + 2 * c_in * h * wo        # bf16 th scratch (persistent)
                + 2 * c_in * t * h         # broadcast L
                + 6 * c_in * t * wo        # tv f32 + bf16 copy
                + 4 * c_out * t * wo)      # f32 output tile
    cands = [t for t in range(1, ho + 1)
             if ho % t == 0
             and (t == ho or (t % 8 == 0 and (t * wo) % 128 == 0))]
    in_budget = [t for t in cands if footprint(t) <= vmem_budget]
    if in_budget:
        return max(in_budget)
    return min(cands)                      # smallest legal tile if budget busted


def upsample_forward(params, x, s_factor):
    """UpSample.forward: up_R = bilinear upsample (align_corners=False) + 1x1 conv."""
    n, c_in, h, w = x.shape
    ho = int(math.floor(h * s_factor))
    wo = int(math.floor(w * s_factor))
    wc = params["up_R_conv_w"]
    c_out = wc.shape[0]

    # Tiny dense interpolation matrices (no gathers anywhere).
    lm = _interp_matrix(h, ho).astype(jnp.bfloat16)        # (Ho, H)
    rm = _interp_matrix(w, wo).T.astype(jnp.bfloat16)      # (W, Wo)
    wc2 = wc.reshape(c_out, c_in).astype(jnp.bfloat16)     # (C_out, C_in)
    # Free row-major reshape; bf16 halves the kernel's input HBM traffic.
    x2 = x.astype(jnp.bfloat16).reshape(n, c_in * h, w)

    t_ho = _pick_row_tile(ho, wo, c_in, c_out, h)
    grid = (n, ho // t_ho)

    # Horizontal interp is computed once per sample (cached in scratch).
    flops = 2 * n * (c_in * h * w * wo              # horizontal (once per sample)
                     + c_in * ho * h * wo           # vertical
                     + c_out * c_in * ho * wo)      # 1x1 conv
    bytes_accessed = (x2.size * 2 + lm.size * 2 + rm.size * 2 + wc2.size * 2
                      + n * c_out * ho * wo * 4)

    out = pl.pallas_call(
        functools.partial(_upsample_conv_kernel,
                          c_in=c_in, h=h, t_ho=t_ho, wo=wo),
        out_shape=jax.ShapeDtypeStruct((n, c_out, ho * wo), jnp.float32),
        grid=grid,
        in_specs=[
            # full low-res sample; block index constant in r -> fetched once/sample
            pl.BlockSpec((None, c_in * h, w), lambda i, r: (i, 0, 0)),
            pl.BlockSpec((w, wo), lambda i, r: (0, 0)),
            pl.BlockSpec((t_ho, h), lambda i, r: (r, 0)),
            pl.BlockSpec((c_out, c_in), lambda i, r: (0, 0)),
        ],
        out_specs=pl.BlockSpec((None, c_out, t_ho * wo), lambda i, r: (i, 0, r)),
        scratch_shapes=[pltpu.VMEM((c_in * h, wo), jnp.bfloat16)],
        compiler_params=pltpu.CompilerParams(
            # row-tile axis must be "arbitrary": the th scratch written at r==0
            # is reused by every later row tile of the same sample.
            dimension_semantics=("parallel", "arbitrary"),
            vmem_limit_bytes=32 * 1024 * 1024),
        cost_estimate=pl.CostEstimate(flops=int(flops), transcendentals=0,
                                      bytes_accessed=int(bytes_accessed)),
    )(x2, rm, lm, wc2)
    # Free row-major reshape back to NCHW.
    return out.reshape(n, c_out, ho, wo)


# ----------------------------------------------------------------------------
# Parameters (PyTorch Conv2d default uniform init) and a pure-JAX reference
# ----------------------------------------------------------------------------

def make_upsample_params(in_channels, out_channels, key):
    bound = 1.0 / math.sqrt(in_channels)   # fan_in = in_channels * 1 * 1
    w = jax.random.uniform(key, (out_channels, in_channels, 1, 1), jnp.float32,
                           -bound, bound)
    # TODO(synk): the up_B branch exists in the PyTorch module but is never used
    # in forward(); only up_R's conv weight is materialized here.
    return {"up_R_conv_w": w}


def upsample_ref(params, x, s_factor):
    """Independent f32 reference (gather-based bilinear + einsum 1x1 conv)."""
    n, c, h, w = x.shape
    ho, wo = int(math.floor(h * s_factor)), int(math.floor(w * s_factor))
    sy = jnp.maximum((jnp.arange(ho, dtype=jnp.float32) + 0.5) * (h / ho) - 0.5, 0.0)
    sx = jnp.maximum((jnp.arange(wo, dtype=jnp.float32) + 0.5) * (w / wo) - 0.5, 0.0)
    y0 = jnp.floor(sy).astype(jnp.int32)
    x0 = jnp.floor(sx).astype(jnp.int32)
    y1 = jnp.minimum(y0 + 1, h - 1)
    x1 = jnp.minimum(x0 + 1, w - 1)
    wy = (sy - y0.astype(jnp.float32))[None, None, :, None]
    wx = (sx - x0.astype(jnp.float32))[None, None, None, :]
    r0 = x[:, :, y0, :]
    r1 = x[:, :, y1, :]
    a = r0[:, :, :, x0] * (1 - wx) + r0[:, :, :, x1] * wx
    b = r1[:, :, :, x0] * (1 - wx) + r1[:, :, :, x1] * wx
    up = a * (1 - wy) + b * wy
    wmat = params["up_R_conv_w"].reshape(params["up_R_conv_w"].shape[0], c)
    return jnp.einsum("oc,nchw->nohw", wmat, up)


# ----------------------------------------------------------------------------
# Main
# ----------------------------------------------------------------------------

if __name__ == "__main__":
    in_channels, out_channels, s_factor = 8, 16, 2
    batch, H, W = 2, 32, 32

    key = jax.random.PRNGKey(0)
    kx, kp = jax.random.split(key)
    x = jax.random.normal(kx, (batch, in_channels, H, W), jnp.float32)
    params = make_upsample_params(in_channels, out_channels, kp)

    fwd = jax.jit(functools.partial(upsample_forward, s_factor=s_factor))
    out = fwd(params, x)
    jax.block_until_ready(out)
    assert out.shape == (batch, out_channels, H * s_factor, W * s_factor)

    # bf16 operands / f32 accumulation -> small drift vs the f32 reference.
    ref = upsample_ref(params, x, s_factor)
    err = float(jnp.max(jnp.abs(out - ref)))
    tol = 5e-2 + 5e-2 * float(jnp.max(jnp.abs(ref)))
    assert err < tol, f"max abs error {err} exceeds {tol}"

    print("KERNEL_OK")
</pallas_src>

<mosaic_0001>
module attributes {stable_mosaic.version = 11 : i64} {
  func.func @_upsample_conv_kernel(%arg0: i32, %arg1: i32, %arg2: memref<1x256x32xbf16, #tpu.memory_space<vmem>>, %arg3: memref<32x64xbf16, #tpu.memory_space<vmem>>, %arg4: memref<64x32xbf16, #tpu.memory_space<vmem>>, %arg5: memref<16x8xbf16, #tpu.memory_space<vmem>>, %arg6: memref<1x16x4096xf32, #tpu.memory_space<vmem>>, %arg7: memref<256x64xbf16, #tpu.memory_space<vmem>>) attributes {dimension_semantics = [#tpu.dimension_semantics<parallel>, #tpu.dimension_semantics<arbitrary>], iteration_bounds = array<i64: 2, 1>, scalar_prefetch = 0 : i64, scratch_operands = 1 : i64, tpu.core_type = #tpu.core_type<tc>, window_params = [{transform_indices = @transform_0, window_bounds = array<i64: 1, 256, 32>}, {pipeline_mode = #tpu.pipeline_mode<synchronous>, transform_indices = @transform_1, window_bounds = array<i64: 32, 64>}, {transform_indices = @transform_2, window_bounds = array<i64: 64, 32>}, {pipeline_mode = #tpu.pipeline_mode<synchronous>, transform_indices = @transform_3, window_bounds = array<i64: 16, 8>}, {transform_indices = @transform_4, window_bounds = array<i64: 1, 16, 4096>}]} {
    %c0_i32 = arith.constant 0 : i32
    %0 = arith.cmpi eq, %arg1, %c0_i32 : i32
    %1 = arith.extui %0 : i1 to i32
    %c0_i32_0 = arith.constant 0 : i32
    %2 = arith.cmpi ne, %1, %c0_i32_0 : i32
    scf.if %2 {
      %c0_10 = arith.constant 0 : index
      %c0_11 = arith.constant 0 : index
      %c0_12 = arith.constant 0 : index
      %17 = vector.load %arg2[%c0_10, %c0_11, %c0_12] : memref<1x256x32xbf16, #tpu.memory_space<vmem>>, vector<1x256x32xbf16>
      %18 = vector.shape_cast %17 : vector<1x256x32xbf16> to vector<256x32xbf16>
      %c0_13 = arith.constant 0 : index
      %c0_14 = arith.constant 0 : index
      %19 = vector.load %arg3[%c0_13, %c0_14] : memref<32x64xbf16, #tpu.memory_space<vmem>>, vector<32x64xbf16>
      %cst_15 = arith.constant dense<0.000000e+00> : vector<256x64xf32>
      %20 = tpu.matmul %18, %19, %cst_15 {dimension_numbers = #tpu.dot_dimension_numbers<[1], [0], [0], [1], [0, 0, 1, 1], [], []>} : vector<256x32xbf16>, vector<32x64xbf16>, vector<256x64xf32> -> vector<256x64xf32>
      %21 = arith.truncf %20 : vector<256x64xf32> to vector<256x64xbf16>
      %c0_16 = arith.constant 0 : index
      %c0_17 = arith.constant 0 : index
      %22 = vector.load %arg7[%c0_16, %c0_17] : memref<256x64xbf16, #tpu.memory_space<vmem>>, vector<256x64xbf16>
      tpu.vector_store %arg7[%c0_16, %c0_17], %21 {strides = array<i32>} : memref<256x64xbf16, #tpu.memory_space<vmem>>, vector<256x64xbf16>,
    } else {
    }
    %c0 = arith.constant 0 : index
    %c0_1 = arith.constant 0 : index
    %3 = vector.load %arg7[%c0, %c0_1] : memref<256x64xbf16, #tpu.memory_space<vmem>>, vector<256x64xbf16>
    %4 = vector.shape_cast %3 : vector<256x64xbf16> to vector<8x32x64xbf16>
    %c0_2 = arith.constant 0 : index
    %c0_3 = arith.constant 0 : index
    %5 = vector.load %arg4[%c0_2, %c0_3] : memref<64x32xbf16, #tpu.memory_space<vmem>>, vector<64x32xbf16>
    %6 = vector.shape_cast %5 : vector<64x32xbf16> to vector<1x64x32xbf16>
    %7 = vector.shape_cast %6 : vector<1x64x32xbf16> to vector<1x64x32xbf16>
    %8 = vector.broadcast %7 : vector<1x64x32xbf16> to vector<8x64x32xbf16>
    "tpu.trace_start"() <{level = 10 : i32, message = "cth,chv->ctv"}> : () -> ()
    %cst = arith.constant dense<0.000000e+00> : vector<8x64x64xf32>
    %9 = tpu.matmul %8, %4, %cst {dimension_numbers = #tpu.dot_dimension_numbers<[2], [1], [1], [2], [0, 0, 0, 1, 1, 2], [0], [0]>} : vector<8x64x32xbf16>, vector<8x32x64xbf16>, vector<8x64x64xf32> -> vector<8x64x64xf32>
    "tpu.trace_stop"() : () -> ()
    %10 = arith.truncf %9 : vector<8x64x64xf32> to vector<8x64x64xbf16>
    %11 = vector.shape_cast %10 : vector<8x64x64xbf16> to vector<8x4096xbf16>
    %c0_4 = arith.constant 0 : index
    %c0_5 = arith.constant 0 : index
    %12 = vector.load %arg5[%c0_4, %c0_5] : memref<16x8xbf16, #tpu.memory_space<vmem>>, vector<16x8xbf16>
    %cst_6 = arith.constant dense<0.000000e+00> : vector<16x4096xf32>
    %13 = tpu.matmul %12, %11, %cst_6 {dimension_numbers = #tpu.dot_dimension_numbers<[1], [0], [0], [1], [0, 0, 1, 1], [], []>} : vector<16x8xbf16>, vector<8x4096xbf16>, vector<16x4096xf32> -> vector<16x4096xf32>
    %c0_7 = arith.constant 0 : index
    %c0_8 = arith.constant 0 : index
    %c0_9 = arith.constant 0 : index
    %14 = vector.load %arg6[%c0_7, %c0_8, %c0_9] : memref<1x16x4096xf32, #tpu.memory_space<vmem>>, vector<1x16x4096xf32>
    %15 = vector.shape_cast %14 : vector<1x16x4096xf32> to vector<16x4096xf32>
    %16 = vector.shape_cast %13 : vector<16x4096xf32> to vector<1x16x4096xf32>
    tpu.vector_store %arg6[%c0_7, %c0_8, %c0_9], %16 {strides = array<i32>} : memref<1x16x4096xf32, #tpu.memory_space<vmem>>, vector<1x16x4096xf32>,
    return
  }
  func.func @transform_0(%arg0: i32, %arg1: i32) -> (i32, i32, i32) {
    %c0_i32 = arith.constant 0 : i32
    %c0_i32_0 = arith.constant 0 : i32
    %c0_i32_1 = arith.constant 0 : i32
    return %arg0, %c0_i32, %c0_i32_0 : i32, i32, i32
  }
  func.func @transform_1(%arg0: i32, %arg1: i32) -> (i32, i32) {
    %c0_i32 = arith.constant 0 : i32
    %c0_i32_0 = arith.constant 0 : i32
    %c0_i32_1 = arith.constant 0 : i32
    return %c0_i32, %c0_i32_0 : i32, i32
  }
  func.func @transform_2(%arg0: i32, %arg1: i32) -> (i32, i32) {
    %c0_i32 = arith.constant 0 : i32
    %c0_i32_0 = arith.constant 0 : i32
    return %arg1, %c0_i32 : i32, i32
  }
  func.func @transform_3(%arg0: i32, %arg1: i32) -> (i32, i32) {
    %c0_i32 = arith.constant 0 : i32
    %c0_i32_0 = arith.constant 0 : i32
    %c0_i32_1 = arith.constant 0 : i32
    return %c0_i32, %c0_i32_0 : i32, i32
  }
  func.func @transform_4(%arg0: i32, %arg1: i32) -> (i32, i32, i32) {
    %c0_i32 = arith.constant 0 : i32
    %c0_i32_0 = arith.constant 0 : i32
    return %arg0, %c0_i32, %arg1 : i32, i32, i32
  }
}

</mosaic_0001>

<llo_original>
// kernel: upsample_forward.1
$region0: #{upsample_forward.1}
  #allocation0 [shape = 'u32[]', space=smem, size = 0x4, offset = 0x4, fixed_abs, tag = 'smem constant byte address 0x4 - core index']
  #allocation1 [shape = 'u32[72,128]{1,0:T(1,128)}', space=vmem, size = 0x9000, scoped, tag = 'internal scratch']
  #allocation2 [shape = 'bf16[256,64]{1,0:T(8,128)(2,1)}', space=vmem, size = 0x10000, scoped, tag = 'scratch operand']
  %s0 = inlined_call_operand.vmem [shape: bf16[2,256,32], index: 0, kind: input, shape index: {}]
  %s1 = inlined_call_operand.vmem [shape: bf16[32,64], index: 1, kind: input, shape index: {}]
  %s2 = inlined_call_operand.vmem [shape: bf16[64,32], index: 2, kind: input, shape index: {}]
  %s3 = inlined_call_operand.vmem [shape: bf16[16,8], index: 3, kind: input, shape index: {}]
  %s4 = inlined_call_operand.vmem [shape: f32[2,16,4096], index: 4, kind: output, shape index: {}]
  %s5 = sld [smem:[#allocation0]]
  $region53: #{upsample_forward.1} parent=0
    _
  %s7 = ssub.s32 1, %s5
  %s8 = scalar_select 0, %s7, %s5
  loop: start=0, step=1, limit=4
  $region2: #{upsample_forward.1} parent=0 // loop_pre_header
    _
  $region3: #{upsample_forward.1} parent=0 // loop_header
    %s10 = sphi 0, %s14
    %p11 = scmp.ge.s32.totalorder %s10, 4
    %s17 = sphi 0, %s29
    %s18 = sphi 0, %s25
    %s19 = sphi 0, %s17
    %s20 = sphi 0, %s18
    %s21 = sphi 0, %s19
    %s22 = sphi 0, %s20
    %s32 = sphi 0, %s34
    %s35 = sphi 0, %s32
    %s36 = sphi 0, %s35
    %s52 = sphi 0, %s36
    %s56 = sphi 0, %s56
    %s58 = sphi 0, %s56
    %s59 = sphi 0, %s58
    %s73 = sphi 0, %s59
    %s79 = sphi 0, %s81
    %s82 = sphi 0, %s79
    %s83 = sphi 0, %s82
    %s99 = sphi 0, %s83
    %s103 = sphi 0, %s103
    %s105 = sphi 0, %s103
    %s106 = sphi 0, %s105
    %s120 = sphi 0, %s106
    %s128 = sphi 0, %s130
    %s131 = sphi 0, %s128
    %s132 = sphi 0, %s131
    %s148 = sphi 0, %s132
  $region4: #{upsample_forward.1} parent=0 // loop_header_branch
    %13 = sbr.rel (%p11) target = $region8
  $region5: #{upsample_forward.1} parent=0 // loop_body
    %s15 = ssub.s32 %s10, 1
    %s16 = ssub.s32 %s10, 2
    %s23 = sadd.s32 1, %s18
    %p24 = scmp.ge.s32.totalorder %s23, 1
    %s25 = scalar_select %p24, 0, %s23
    %s26 = sadd.s32 1, %s17
    %s27 = scalar_select %p24, %s26, %s17
    %p28 = scmp.ge.s32.totalorder %s27, 2
    %s29 = scalar_select %p28, 0, %s27
    %s30 = ssub.s32 %s17, %s29
    %p31 = scmp.eq.s32.totalorder %s30, 0
    %s33 = sadd.s32 %s32, 1
    %s34 = scalar_select %p31, %s32, %s33
    %p37 = pneg %p31
    %p38 = scmp.eq.s32.totalorder %s10, 1
    %p39 = por %p37, %p38
    %p40 = scmp.ne.s32.totalorder %s32, %s35
    %p41 = scmp.eq.s32.totalorder %s10, 0
    %p42 = por %p40, %p41
    %p43 = scmp.ne.s32.totalorder %s32, %s35
    %p44 = scmp.eq.s32.totalorder %s15, 1
    %p45 = por %p43, %p44
    %p46 = scmp.ne.s32.totalorder %s35, %s36
    %p47 = scmp.eq.s32.totalorder %s15, 0
    %p48 = por %p46, %p47
    %p49 = scmp.ne.s32.totalorder %s35, %s36
    %p50 = scmp.eq.s32.totalorder %s16, 1
    %p51 = por %p49, %p50
    %p53 = scmp.ne.s32.totalorder %s36, %s52
    %p54 = scmp.eq.s32.totalorder %s16, 0
    %p55 = por %p53, %p54
    %s57 = sadd.s32 %s56, 1
    %p60 = scmp.eq.s32.totalorder %s10, 1
    %p61 = scmp.ne.s32.totalorder %s56, %s58
    %p62 = scmp.eq.s32.totalorder %s10, 0
    %p63 = por %p61, %p62
    %p64 = scmp.ne.s32.totalorder %s56, %s58
    %p65 = scmp.eq.s32.totalorder %s15, 1
    %p66 = por %p64, %p65
    %p67 = scmp.ne.s32.totalorder %s58, %s59
    %p68 = scmp.eq.s32.totalorder %s15, 0
    %p69 = por %p67, %p68
    %p70 = scmp.ne.s32.totalorder %s58, %s59
    %p71 = scmp.eq.s32.totalorder %s16, 1
    %p72 = por %p70, %p71
    %p74 = scmp.ne.s32.totalorder %s59, %s73
    %p75 = scmp.eq.s32.totalorder %s16, 0
    %p76 = por %p74, %p75
    %s77 = ssub.s32 %s18, %s25
    %p78 = scmp.eq.s32.totalorder %s77, 0
    %s80 = sadd.s32 %s79, 1
    %s81 = scalar_select %p78, %s79, %s80
    %p84 = pneg %p78
    %p85 = scmp.eq.s32.totalorder %s10, 1
    %p86 = por %p84, %p85
    %p87 = scmp.ne.s32.totalorder %s79, %s82
    %p88 = scmp.eq.s32.totalorder %s10, 0
    %p89 = por %p87, %p88
    %p90 = scmp.ne.s32.totalorder %s79, %s82
    %p91 = scmp.eq.s32.totalorder %s15, 1
    %p92 = por %p90, %p91
    %p93 = scmp.ne.s32.totalorder %s82, %s83
    %p94 = scmp.eq.s32.totalorder %s15, 0
    %p95 = por %p93, %p94
    %p96 = scmp.ne.s32.totalorder %s82, %s83
    %p97 = scmp.eq.s32.totalorder %s16, 1
    %p98 = por %p96, %p97
    %p100 = scmp.ne.s32.totalorder %s83, %s99
    %p101 = scmp.eq.s32.totalorder %s16, 0
    %p102 = por %p100, %p101
    %s104 = sadd.s32 %s103, 1
    %p107 = scmp.eq.s32.totalorder %s10, 1
    %p108 = scmp.ne.s32.totalorder %s103, %s105
    %p109 = scmp.eq.s32.totalorder %s10, 0
    %p110 = por %p108, %p109
    %p111 = scmp.ne.s32.totalorder %s103, %s105
    %p112 = scmp.eq.s32.totalorder %s15, 1
    %p113 = por %p111, %p112
    %p114 = scmp.ne.s32.totalorder %s105, %s106
    %p115 = scmp.eq.s32.totalorder %s15, 0
    %p116 = por %p114, %p115
    %p117 = scmp.ne.s32.totalorder %s105, %s106
    %p118 = scmp.eq.s32.totalorder %s16, 1
    %p119 = por %p117, %p118
    %p121 = scmp.ne.s32.totalorder %s106, %s120
    %p122 = scmp.eq.s32.totalorder %s16, 0
    %p123 = por %p121, %p122
    %s124 = ssub.s32 %s17, %s29
    %s125 = ssub.s32 %s18, %s25
    %s126 = sor.u32 %s124, %s125
    %p127 = scmp.eq.s32.totalorder %s126, 0
    %s129 = sadd.s32 %s128, 1
    %s130 = scalar_select %p127, %s128, %s129
    %p133 = pneg %p127
    %p134 = scmp.eq.s32.totalorder %s10, 1
    %p135 = por %p133, %p134
    %p136 = scmp.ne.s32.totalorder %s128, %s131
    %p137 = scmp.eq.s32.totalorder %s10, 0
    %p138 = por %p136, %p137
    %p139 = scmp.ne.s32.totalorder %s128, %s131
    %p140 = scmp.eq.s32.totalorder %s15, 1
    %p141 = por %p139, %p140
    %p142 = scmp.ne.s32.totalorder %s131, %s132
    %p143 = scmp.eq.s32.totalorder %s15, 0
    %p144 = por %p142, %p143
    %p145 = scmp.ne.s32.totalorder %s131, %s132
    %p146 = scmp.eq.s32.totalorder %s16, 1
    %p147 = por %p145, %p146
    %p149 = scmp.ne.s32.totalorder %s132, %s148
    %p150 = scmp.eq.s32.totalorder %s16, 0
    %p151 = por %p149, %p150
    %p152 = scmp.le.s32.totalorder 1, %s10
    %p153 = scmp.lt.s32.totalorder %s10, 3
    %p154 = pnand %p152, %p153
    %p155 = pneg %p154
    // Predicated region
    $region9: #{upsample_forward.1} parent=5 // pred_check
      _
    $region10: #{upsample_forward.1} parent=5 // pred_check_branch
      %157 = sbr.rel (%p154) target = $region12
    $region11: #{upsample_forward.1} parent=5 // pred_region
      %s158 = ssub.s32 %s10, 1
      // Predicated region
      $region13: #{upsample_forward.1} parent=11 // pred_check
        %p159 = pneg %p69
      $region14: #{upsample_forward.1} parent=11 // pred_check_branch
        %161 = sbr.rel (%p159) target = $region16
      $region15: #{upsample_forward.1} parent=11 // pred_region
        _
      $region16: #{upsample_forward.1} parent=11 // pred_fallthru
        _
      // Predicated region
      $region17: #{upsample_forward.1} parent=11 // pred_check
        %p162 = pneg %p95
      $region18: #{upsample_forward.1} parent=11 // pred_check_branch
        %164 = sbr.rel (%p162) target = $region20
      $region19: #{upsample_forward.1} parent=11 // pred_region
        %s165 = smul.u32 8, %s20
        %p166 = scmp.lt.s32.totalorder %s165, 7
        %s167 = scalar_select %p166, %s165, 7
        %s168 = smul.addr %s167, 4
        %s169 = scalar_lea.vmem %s2, %s168
        %s170 = smul.u32 8, %s20
      $region20: #{upsample_forward.1} parent=11 // pred_fallthru
        _
      // Predicated region
      $region21: #{upsample_forward.1} parent=11 // pred_check
        %p171 = pneg %p116
      $region22: #{upsample_forward.1} parent=11 // pred_check_branch
        %173 = sbr.rel (%p171) target = $region24
      $region23: #{upsample_forward.1} parent=11 // pred_region
        _
      $region24: #{upsample_forward.1} parent=11 // pred_fallthru
        _
    $region12: #{upsample_forward.1} parent=5 // pred_fallthru
      _
    %p174 = scmp.lt.s32.totalorder %s10, 2
    // Predicated region
    $region25: #{upsample_forward.1} parent=5 // pred_check
      %p175 = pneg %p174
    $region26: #{upsample_forward.1} parent=5 // pred_check_branch
      %177 = sbr.rel (%p175) target = $region28
    $region27: #{upsample_forward.1} parent=5 // pred_region
      // Predicated region
      $region29: #{upsample_forward.1} parent=27 // pred_check
        %p178 = pneg %p42
      $region30: #{upsample_forward.1} parent=27 // pred_check_branch
        %180 = sbr.rel (%p178) target = $region32
      $region31: #{upsample_forward.1} parent=27 // pred_region
        %p181 = scmp.lt.s32.totalorder %s17, 1
        %s182 = scalar_select %p181, %s17, 1
        %s183 = smul.addr %s182, 32
        %s184 = smul.addr %s183, 4
        %s185 = scalar_lea.vmem %s0, %s184
      $region32: #{upsample_forward.1} parent=27 // pred_fallthru
        _
    $region28: #{upsample_forward.1} parent=5 // pred_fallthru
      _
    %p186 = scmp.le.s32.totalorder 1, %s10
    %p187 = scmp.lt.s32.totalorder %s10, 3
    %p188 = pnand %p186, %p187
    %p189 = pneg %p188
    // Predicated region
    $region33: #{upsample_forward.1} parent=5 // pred_check
      _
    $region34: #{upsample_forward.1} parent=5 // pred_check_branch
      %191 = sbr.rel (%p188) target = $region36
    $region35: #{upsample_forward.1} parent=5 // pred_region
      %s192 = ssub.s32 %s10, 1
      %p193 = scmp.lt.s32.totalorder %s19, 1
      %s194 = scalar_select %p193, %s19, 1
      %s195 = smul.addr %s194, 32
      %s196 = smul.addr %s195, 4
      %s197 = scalar_lea.vmem %s0, %s196
      %p198 = pneg %p48
      %p199 = pneg %p45
      %p200 = pneg %p69
      %p201 = pneg %p66
      %s202 = smul.u32 8, %s20
      %p203 = scmp.lt.s32.totalorder %s202, 7
      %s204 = scalar_select %p203, %s202, 7
      %s205 = smul.addr %s204, 4
      %s206 = scalar_lea.vmem %s2, %s205
      %p207 = pneg %p95
      %p208 = pneg %p92
      %p209 = pneg %p116
      %p210 = pneg %p113
      %p211 = pneg %p144
      %p212 = pneg %p141
      %s213 = smul.u32 32, %s20
      %p214 = scmp.lt.s32.totalorder %s19, 1
      %s215 = scalar_select %p214, %s19, 1
      %p216 = scmp.lt.s32.totalorder %s213, 31
      %s217 = scalar_select %p216, %s213, 31
      %s218 = smul.addr %s215, 64
      %s219 = sadd.s32 %s217, %s218
      %s220 = smul.addr %s219, 8
      %s221 = scalar_lea.vmem %s4, %s220
      %p222 = scmp.lt.s32.totalorder %s19, 1
      %s223 = scalar_select %p222, %s19, 1
      %s224 = smul.addr %s223, 32
      %s225 = smul.addr %s224, 4
      %s226 = scalar_lea.vmem %s0, %s225
      %s227 = smul.u32 8, %s20
      %p228 = scmp.lt.s32.totalorder %s227, 7
      %s229 = scalar_select %p228, %s227, 7
      %s230 = smul.addr %s229, 4
      %s231 = scalar_lea.vmem %s2, %s230
      %s232 = smul.u32 8, %s20
      %s233 = smul.u32 32, %s20
      %p234 = scmp.lt.s32.totalorder %s19, 1
      %s235 = scalar_select %p234, %s19, 1
      %p236 = scmp.lt.s32.totalorder %s233, 31
      %s237 = scalar_select %p236, %s233, 31
      %s238 = smul.addr %s235, 64
      %s239 = sadd.s32 %s237, %s238
      %s240 = smul.addr %s239, 8
      %s241 = scalar_lea.vmem %s4, %s240
      %s242 = smul.u32 32, %s20
      %p244 = scmp.eq.s32.totalorder %s20, 0
      // Predicated region
      $region37: #{upsample_forward.1} parent=35 // pred_check
        %p245 = pneg %p244
      $region38: #{upsample_forward.1} parent=35 // pred_check_branch
        %247 = sbr.rel (%p245) target = $region40
      $region39: #{upsample_forward.1} parent=35 // pred_region
        %v248 = vld [vmem:[%s226] sm:$0xf]
        %v249 = vld [vmem:[%s226 + $0x4] sm:$0xf]
        %v250 = vld [vmem:[%s226 + $0x8] sm:$0xf]
        %v251 = vld [vmem:[%s226 + $0xc] sm:$0xf]
        %v252 = vld [vmem:[%s226 + $0x10] sm:$0xf]
        %v253 = vld [vmem:[%s226 + $0x14] sm:$0xf]
        %v254 = vld [vmem:[%s226 + $0x18] sm:$0xf]
        %v255 = vld [vmem:[%s226 + $0x1c] sm:$0xf]
        %v256 = vld [vmem:[%s226 + $0x20] sm:$0xf]
        %v257 = vld [vmem:[%s226 + $0x24] sm:$0xf]
        %v258 = vld [vmem:[%s226 + $0x28] sm:$0xf]
        %v259 = vld [vmem:[%s226 + $0x2c] sm:$0xf]
        %v260 = vld [vmem:[%s226 + $0x30] sm:$0xf]
        %v261 = vld [vmem:[%s226 + $0x34] sm:$0xf]
        %v262 = vld [vmem:[%s226 + $0x38] sm:$0xf]
        %v263 = vld [vmem:[%s226 + $0x3c] sm:$0xf]
        %v264 = vld [vmem:[%s226 + $0x40] sm:$0xf]
        %v265 = vld [vmem:[%s226 + $0x44] sm:$0xf]
        %v266 = vld [vmem:[%s226 + $0x48] sm:$0xf]
        %v267 = vld [vmem:[%s226 + $0x4c] sm:$0xf]
        %v268 = vld [vmem:[%s226 + $0x50] sm:$0xf]
        %v269 = vld [vmem:[%s226 + $0x54] sm:$0xf]
        %v270 = vld [vmem:[%s226 + $0x58] sm:$0xf]
        %v271 = vld [vmem:[%s226 + $0x5c] sm:$0xf]
        %v272 = vld [vmem:[%s226 + $0x60] sm:$0xf]
        %v273 = vld [vmem:[%s226 + $0x64] sm:$0xf]
        %v274 = vld [vmem:[%s226 + $0x68] sm:$0xf]
        %v275 = vld [vmem:[%s226 + $0x6c] sm:$0xf]
        %v276 = vld [vmem:[%s226 + $0x70] sm:$0xf]
        %v277 = vld [vmem:[%s226 + $0x74] sm:$0xf]
        %v278 = vld [vmem:[%s226 + $0x78] sm:$0xf]
        %v279 = vld [vmem:[%s226 + $0x7c] sm:$0xf]
        %v280 = vld [vmem:[%s1] sm:$0xf]
        %v281 = vld [vmem:[%s1 + $0x4] sm:$0xf]
        %v282 = vld [vmem:[%s1 + $0x8] sm:$0xf]
        %v283 = vld [vmem:[%s1 + $0xc] sm:$0xf]
        %v316 = vunpack.c.l.b16 %v248
        %v317 = vunpack.c.l.b16 %v249
        %v318 = vunpack.c.l.b16 %v250
        %v319 = vunpack.c.l.b16 %v251
        %v320 = vunpack.c.l.b16 %v252
        %v321 = vunpack.c.l.b16 %v253
        %v322 = vunpack.c.l.b16 %v254
        %v323 = vunpack.c.l.b16 %v255
        %v324 = vunpack.c.l.b16 %v256
        %v325 = vunpack.c.l.b16 %v257
        %v326 = vunpack.c.l.b16 %v258
        %v327 = vunpack.c.l.b16 %v259
        %v328 = vunpack.c.l.b16 %v260
        %v329 = vunpack.c.l.b16 %v261
        %v330 = vunpack.c.l.b16 %v262
        %v331 = vunpack.c.l.b16 %v263
        %v332 = vunpack.c.l.b16 %v264
        %v333 = vunpack.c.l.b16 %v265
        %v334 = vunpack.c.l.b16 %v266
        %v335 = vunpack.c.l.b16 %v267
        %v336 = vunpack.c.l.b16 %v268
        %v337 = vunpack.c.l.b16 %v269
        %v338 = vunpack.c.l.b16 %v270
        %v339 = vunpack.c.l.b16 %v271
        %v340 = vunpack.c.l.b16 %v272
        %v341 = vunpack.c.l.b16 %v273
        %v342 = vunpack.c.l.b16 %v274
        %v343 = vunpack.c.l.b16 %v275
        %v344 = vunpack.c.l.b16 %v276
        %v345 = vunpack.c.l.b16 %v277
        %v346 = vunpack.c.l.b16 %v278
        %v347 = vunpack.c.l.b16 %v279
        %v348 = vpack.c.b16 %v317, %v316
        %v349 = vpack.c.b16 %v319, %v318
        %v350 = vpack.c.b16 %v321, %v320
        %v351 = vpack.c.b16 %v323, %v322
        %v352 = vpack.c.b16 %v325, %v324
        %v353 = vpack.c.b16 %v327, %v326
        %v354 = vpack.c.b16 %v329, %v328
        %v355 = vpack.c.b16 %v331, %v330
        %v356 = vpack.c.b16 %v333, %v332
        %v357 = vpack.c.b16 %v335, %v334
        %v358 = vpack.c.b16 %v337, %v336
        %v359 = vpack.c.b16 %v339, %v338
        %v360 = vpack.c.b16 %v341, %v340
        %v361 = vpack.c.b16 %v343, %v342
        %v362 = vpack.c.b16 %v345, %v344
        %v363 = vpack.c.b16 %v347, %v346
        %v368 = vunpack.c.l.b16 %v280
        %v369 = vunpack.c.l.b16 %v281
        %v370 = vunpack.c.l.b16 %v282
        %v371 = vunpack.c.l.b16 %v283
        %v372 = vpack.c.b16 %v369, %v368
        %v373 = vpack.c.b16 %v371, %v370
        %vm376 = vcmask 261120
        %v378 = vsel %vm376, %v348, 0
        %v381 = vsel %vm376, %v349, 0
        %v384 = vsel %vm376, %v350, 0
        %v387 = vsel %vm376, %v351, 0
        %v390 = vsel %vm376, %v352, 0
        %v393 = vsel %vm376, %v353, 0
        %v396 = vsel %vm376, %v354, 0
        %v399 = vsel %vm376, %v355, 0
        %v402 = vsel %vm376, %v356, 0
        %v405 = vsel %vm376, %v357, 0
        %v408 = vsel %vm376, %v358, 0
        %v411 = vsel %vm376, %v359, 0
        %v414 = vsel %vm376, %v360, 0
        %v417 = vsel %vm376, %v361, 0
        %v420 = vsel %vm376, %v362, 0
        %v423 = vsel %vm376, %v363, 0
        %425 = vmatpush.bf16.msra.mxu0 0
        %426 = vmatpush.bf16.msra.mxu0 0
        %427 = vmatpush.bf16.msra.mxu0 0
        %428 = vmatpush.bf16.msra.mxu0 0
        %429 = vmatpush.bf16.msra.mxu0 0
        %430 = vmatpush.bf16.msra.mxu0 0
        %431 = vmatpush.bf16.msra.mxu0 %v373
        %432 = vmatpush.bf16.msra.mxu0 %v372
        %433 = vmatmul.bf16.gmra.mxu0 %v378
        %v434 = vpop.f32.mrf.mxu0
        %v435 = vadd.f32 0.0, %v434
        %v436 = vpop.f32.mrf.mxu0
        %v437 = vadd.f32 0.0, %v436
        %438 = vmatmul.bf16.gmra.mxu0 %v381
        %v439 = vpop.f32.mrf.mxu0
        %v440 = vadd.f32 0.0, %v439
        %v441 = vpop.f32.mrf.mxu0
        %v442 = vadd.f32 0.0, %v441
        %443 = vmatmul.bf16.gmra.mxu0 %v384
        %v444 = vpop.f32.mrf.mxu0
        %v445 = vadd.f32 0.0, %v444
        %v446 = vpop.f32.mrf.mxu0
        %v447 = vadd.f32 0.0, %v446
        %448 = vmatmul.bf16.gmra.mxu0 %v387
        %v449 = vpop.f32.mrf.mxu0
        %v450 = vadd.f32 0.0, %v449
        %v451 = vpop.f32.mrf.mxu0
        %v452 = vadd.f32 0.0, %v451
        %453 = vmatmul.bf16.gmra.mxu0 %v390
        %v454 = vpop.f32.mrf.mxu0
        %v455 = vadd.f32 0.0, %v454
        %v456 = vpop.f32.mrf.mxu0
        %v457 = vadd.f32 0.0, %v456
        %458 = vmatmul.bf16.gmra.mxu0 %v393
        %v459 = vpop.f32.mrf.mxu0
        %v460 = vadd.f32 0.0, %v459
        %v461 = vpop.f32.mrf.mxu0
        %v462 = vadd.f32 0.0, %v461
        %463 = vmatmul.bf16.gmra.mxu0 %v396
        %v464 = vpop.f32.mrf.mxu0
        %v465 = vadd.f32 0.0, %v464
        %v466 = vpop.f32.mrf.mxu0
        %v467 = vadd.f32 0.0, %v466
        %468 = vmatmul.bf16.gmra.mxu0 %v399
        %v469 = vpop.f32.mrf.mxu0
        %v470 = vadd.f32 0.0, %v469
        %v471 = vpop.f32.mrf.mxu0
        %v472 = vadd.f32 0.0, %v471
        %473 = vmatmul.bf16.gmra.mxu0 %v402
        %v474 = vpop.f32.mrf.mxu0
        %v475 = vadd.f32 0.0, %v474
        %v476 = vpop.f32.mrf.mxu0
        %v477 = vadd.f32 0.0, %v476
        %478 = vmatmul.bf16.gmra.mxu0 %v405
        %v479 = vpop.f32.mrf.mxu0
        %v480 = vadd.f32 0.0, %v479
        %v481 = vpop.f32.mrf.mxu0
        %v482 = vadd.f32 0.0, %v481
        %483 = vmatmul.bf16.gmra.mxu0 %v408
        %v484 = vpop.f32.mrf.mxu0
        %v485 = vadd.f32 0.0, %v484
        %v486 = vpop.f32.mrf.mxu0
        %v487 = vadd.f32 0.0, %v486
        %488 = vmatmul.bf16.gmra.mxu0 %v411
        %v489 = vpop.f32.mrf.mxu0
        %v490 = vadd.f32 0.0, %v489
        %v491 = vpop.f32.mrf.mxu0
        %v492 = vadd.f32 0.0, %v491
        %493 = vmatmul.bf16.gmra.mxu0 %v414
        %v494 = vpop.f32.mrf.mxu0
        %v495 = vadd.f32 0.0, %v494
        %v496 = vpop.f32.mrf.mxu0
        %v497 = vadd.f32 0.0, %v496
        %498 = vmatmul.bf16.gmra.mxu0 %v417
        %v499 = vpop.f32.mrf.mxu0
        %v500 = vadd.f32 0.0, %v499
        %v501 = vpop.f32.mrf.mxu0
        %v502 = vadd.f32 0.0, %v501
        %503 = vmatmul.bf16.gmra.mxu0 %v420
        %v504 = vpop.f32.mrf.mxu0
        %v505 = vadd.f32 0.0, %v504
        %v506 = vpop.f32.mrf.mxu0
        %v507 = vadd.f32 0.0, %v506
        %508 = vmatmul.bf16.gmra.mxu0 %v423
        %v509 = vpop.f32.mrf.mxu0
        %v510 = vadd.f32 0.0, %v509
        %v511 = vpop.f32.mrf.mxu0
        %v512 = vadd.f32 0.0, %v511
        %513 = vdwg.mxu0
        %v514 = vpack.c.bf16 %v435, %v435
        %v515 = vpack.c.bf16 %v437, %v437
        %v516 = vpack.c.bf16 %v440, %v440
        %v517 = vpack.c.bf16 %v442, %v442
        %v518 = vpack.c.bf16 %v445, %v445
        %v519 = vpack.c.bf16 %v447, %v447
        %v520 = vpack.c.bf16 %v450, %v450
        %v521 = vpack.c.bf16 %v452, %v452
        %v522 = vpack.c.bf16 %v455, %v455
        %v523 = vpack.c.bf16 %v457, %v457
        %v524 = vpack.c.bf16 %v460, %v460
        %v525 = vpack.c.bf16 %v462, %v462
        %v526 = vpack.c.bf16 %v465, %v465
        %v527 = vpack.c.bf16 %v467, %v467
        %v528 = vpack.c.bf16 %v470, %v470
        %v529 = vpack.c.bf16 %v472, %v472
        %v530 = vpack.c.bf16 %v475, %v475
        %v531 = vpack.c.bf16 %v477, %v477
        %v532 = vpack.c.bf16 %v480, %v480
        %v533 = vpack.c.bf16 %v482, %v482
        %v534 = vpack.c.bf16 %v485, %v485
        %v535 = vpack.c.bf16 %v487, %v487
        %v536 = vpack.c.bf16 %v490, %v490
        %v537 = vpack.c.bf16 %v492, %v492
        %v538 = vpack.c.bf16 %v495, %v495
        %v539 = vpack.c.bf16 %v497, %v497
        %v540 = vpack.c.bf16 %v500, %v500
        %v541 = vpack.c.bf16 %v502, %v502
        %v542 = vpack.c.bf16 %v505, %v505
        %v543 = vpack.c.bf16 %v507, %v507
        %v544 = vpack.c.bf16 %v510, %v510
        %v545 = vpack.c.bf16 %v512, %v512
        %vm546 = vcmask 519168
        %547 = vst.msk [vmem:[#allocation2] sm:$0xf] %vm546, %v514
        %548 = vst.msk [vmem:[#allocation2 + $0x4] sm:$0xf] %vm546, %v515
        %549 = vst.msk [vmem:[#allocation2 + $0x8] sm:$0xf] %vm546, %v516
        %550 = vst.msk [vmem:[#allocation2 + $0xc] sm:$0xf] %vm546, %v517
        %551 = vst.msk [vmem:[#allocation2 + $0x10] sm:$0xf] %vm546, %v518
        %552 = vst.msk [vmem:[#allocation2 + $0x14] sm:$0xf] %vm546, %v519
        %553 = vst.msk [vmem:[#allocation2 + $0x18] sm:$0xf] %vm546, %v520
        %554 = vst.msk [vmem:[#allocation2 + $0x1c] sm:$0xf] %vm546, %v521
        %555 = vst.msk [vmem:[#allocation2 + $0x20] sm:$0xf] %vm546, %v522
        %556 = vst.msk [vmem:[#allocation2 + $0x24] sm:$0xf] %vm546, %v523
        %557 = vst.msk [vmem:[#allocation2 + $0x28] sm:$0xf] %vm546, %v524
        %558 = vst.msk [vmem:[#allocation2 + $0x2c] sm:$0xf] %vm546, %v525
        %559 = vst.msk [vmem:[#allocation2 + $0x30] sm:$0xf] %vm546, %v526
        %560 = vst.msk [vmem:[#allocation2 + $0x34] sm:$0xf] %vm546, %v527
        %561 = vst.msk [vmem:[#allocation2 + $0x38] sm:$0xf] %vm546, %v528
        %562 = vst.msk [vmem:[#allocation2 + $0x3c] sm:$0xf] %vm546, %v529
        %563 = vst.msk [vmem:[#allocation2 + $0x40] sm:$0xf] %vm546, %v530
        %564 = vst.msk [vmem:[#allocation2 + $0x44] sm:$0xf] %vm546, %v531
        %565 = vst.msk [vmem:[#allocation2 + $0x48] sm:$0xf] %vm546, %v532
        %566 = vst.msk [vmem:[#allocation2 + $0x4c] sm:$0xf] %vm546, %v533
        %567 = vst.msk [vmem:[#allocation2 + $0x50] sm:$0xf] %vm546, %v534
        %568 = vst.msk [vmem:[#allocation2 + $0x54] sm:$0xf] %vm546, %v535
        %569 = vst.msk [vmem:[#allocation2 + $0x58] sm:$0xf] %vm546, %v536
        %570 = vst.msk [vmem:[#allocation2 + $0x5c] sm:$0xf] %vm546, %v537
        %571 = vst.msk [vmem:[#allocation2 + $0x60] sm:$0xf] %vm546, %v538
        %572 = vst.msk [vmem:[#allocation2 + $0x64] sm:$0xf] %vm546, %v539
        %573 = vst.msk [vmem:[#allocation2 + $0x68] sm:$0xf] %vm546, %v540
        %574 = vst.msk [vmem:[#allocation2 + $0x6c] sm:$0xf] %vm546, %v541
        %575 = vst.msk [vmem:[#allocation2 + $0x70] sm:$0xf] %vm546, %v542
        %576 = vst.msk [vmem:[#allocation2 + $0x74] sm:$0xf] %vm546, %v543
        %577 = vst.msk [vmem:[#allocation2 + $0x78] sm:$0xf] %vm546, %v544
        %578 = vst.msk [vmem:[#allocation2 + $0x7c] sm:$0xf] %vm546, %v545
      $region40: #{upsample_forward.1} parent=35 // pred_fallthru
        _
      %v579 = vld [vmem:[#allocation2] sm:$0xf]
      %v580 = vld [vmem:[#allocation2 + $0x4] sm:$0xf]
      %v581 = vld [vmem:[#allocation2 + $0x8] sm:$0xf]
      %v582 = vld [vmem:[#allocation2 + $0xc] sm:$0xf]
      %v583 = vld [vmem:[#allocation2 + $0x10] sm:$0xf]
      %v584 = vld [vmem:[#allocation2 + $0x14] sm:$0xf]
      %v585 = vld [vmem:[#allocation2 + $0x18] sm:$0xf]
      %v586 = vld [vmem:[#allocation2 + $0x1c] sm:$0xf]
      %v587 = vld [vmem:[#allocation2 + $0x20] sm:$0xf]
      %v588 = vld [vmem:[#allocation2 + $0x24] sm:$0xf]
      %v589 = vld [vmem:[#allocation2 + $0x28] sm:$0xf]
      %v590 = vld [vmem:[#allocation2 + $0x2c] sm:$0xf]
      %v591 = vld [vmem:[#allocation2 + $0x30] sm:$0xf]
      %v592 = vld [vmem:[#allocation2 + $0x34] sm:$0xf]
      %v593 = vld [vmem:[#allocation2 + $0x38] sm:$0xf]
      %v594 = vld [vmem:[#allocation2 + $0x3c] sm:$0xf]
      %v595 = vld [vmem:[#allocation2 + $0x40] sm:$0xf]
      %v596 = vld [vmem:[#allocation2 + $0x44] sm:$0xf]
      %v597 = vld [vmem:[#allocation2 + $0x48] sm:$0xf]
      %v598 = vld [vmem:[#allocation2 + $0x4c] sm:$0xf]
      %v599 = vld [vmem:[#allocation2 + $0x50] sm:$0xf]
      %v600 = vld [vmem:[#allocation2 + $0x54] sm:$0xf]
      %v601 = vld [vmem:[#allocation2 + $0x58] sm:$0xf]
      %v602 = vld [vmem:[#allocation2 + $0x5c] sm:$0xf]
      %v603 = vld [vmem:[#allocation2 + $0x60] sm:$0xf]
      %v604 = vld [vmem:[#allocation2 + $0x64] sm:$0xf]
      %v605 = vld [vmem:[#allocation2 + $0x68] sm:$0xf]
      %v606 = vld [vmem:[#allocation2 + $0x6c] sm:$0xf]
      %v607 = vld [vmem:[#allocation2 + $0x70] sm:$0xf]
      %v608 = vld [vmem:[#allocation2 + $0x74] sm:$0xf]
      %v609 = vld [vmem:[#allocation2 + $0x78] sm:$0xf]
      %v610 = vld [vmem:[#allocation2 + $0x7c] sm:$0xf]
      %v611 = vld [vmem:[%s231] sm:$0xf]
      %v612 = vld [vmem:[%s231 + $0x4] sm:$0xf]
      %v613 = vld [vmem:[%s231 + $0x8] sm:$0xf]
      %v614 = vld [vmem:[%s231 + $0xc] sm:$0xf]
      %v615 = vld [vmem:[%s231 + $0x10] sm:$0xf]
      %v616 = vld [vmem:[%s231 + $0x14] sm:$0xf]
      %v617 = vld [vmem:[%s231 + $0x18] sm:$0xf]
      %v618 = vld [vmem:[%s231 + $0x1c] sm:$0xf]
      %v627 = vunpack.c.l.b16 %v611
      %v628 = vunpack.c.l.b16 %v612
      %v629 = vunpack.c.l.b16 %v613
      %v630 = vunpack.c.l.b16 %v614
      %v631 = vunpack.c.l.b16 %v615
      %v632 = vunpack.c.l.b16 %v616
      %v633 = vunpack.c.l.b16 %v617
      %v634 = vunpack.c.l.b16 %v618
      %v635 = vpack.c.b16 %v628, %v627
      %v636 = vpack.c.b16 %v630, %v629
      %v637 = vpack.c.b16 %v632, %v631
      %v638 = vpack.c.b16 %v634, %v633
      %v643 = vunpack.c.l.b16 %v579
      %v644 = vunpack.c.l.b16 %v580
      %v645 = vunpack.c.l.b16 %v581
      %v646 = vunpack.c.l.b16 %v582
      %v647 = vpack.c.b16 %v644, %v643
      %v648 = vpack.c.b16 %v646, %v645
      %vm651 = vcmask 261120
      %v653 = vsel %vm651, %v635, 0
      %v656 = vsel %vm651, %v636, 0
      %v659 = vsel %vm651, %v637, 0
      %v662 = vsel %vm651, %v638, 0
      %664 = vmatpush.bf16.msra.mxu0 0
      %665 = vmatpush.bf16.msra.mxu0 0
      %666 = vmatpush.bf16.msra.mxu0 0
      %667 = vmatpush.bf16.msra.mxu0 0
      %668 = vmatpush.bf16.msra.mxu0 0
      %669 = vmatpush.bf16.msra.mxu0 0
      %670 = vmatpush.bf16.msra.mxu0 %v648
      %671 = vmatpush.bf16.msra.mxu0 %v647
      %672 = vmatmul.bf16.gmra.mxu0 %v653
      %v673 = vpop.f32.mrf.mxu0
      %v674 = vadd.f32 0.0, %v673
      %v675 = vpop.f32.mrf.mxu0
      %v676 = vadd.f32 0.0, %v675
      %677 = vmatmul.bf16.gmra.mxu0 %v656
      %v678 = vpop.f32.mrf.mxu0
      %v679 = vadd.f32 0.0, %v678
      %v680 = vpop.f32.mrf.mxu0
      %v681 = vadd.f32 0.0, %v680
      %682 = vmatmul.bf16.gmra.mxu0 %v659
      %v683 = vpop.f32.mrf.mxu0
      %v684 = vadd.f32 0.0, %v683
      %v685 = vpop.f32.mrf.mxu0
      %v686 = vadd.f32 0.0, %v685
      %687 = vmatmul.bf16.gmra.mxu0 %v662
      %v688 = vpop.f32.mrf.mxu0
      %v689 = vadd.f32 0.0, %v688
      %v690 = vpop.f32.mrf.mxu0
      %v691 = vadd.f32 0.0, %v690
      %692 = vdwg.mxu0
      %v697 = vunpack.c.l.b16 %v583
      %v698 = vunpack.c.l.b16 %v584
      %v699 = vunpack.c.l.b16 %v585
      %v700 = vunpack.c.l.b16 %v586
      %v701 = vpack.c.b16 %v698, %v697
      %v702 = vpack.c.b16 %v700, %v699
      %705 = vmatpush.bf16.msra.mxu0 0
      %706 = vmatpush.bf16.msra.mxu0 0
      %707 = vmatpush.bf16.msra.mxu0 0
      %708 = vmatpush.bf16.msra.mxu0 0
      %709 = vmatpush.bf16.msra.mxu0 0
      %710 = vmatpush.bf16.msra.mxu0 0
      %711 = vmatpush.bf16.msra.mxu0 %v702
      %712 = vmatpush.bf16.msra.mxu0 %v701
      %713 = vmatmul.bf16.gmra.mxu0 %v653
      %v714 = vpop.f32.mrf.mxu0
      %v715 = vadd.f32 0.0, %v714
      %v716 = vpop.f32.mrf.mxu0
      %v717 = vadd.f32 0.0, %v716
      %718 = vmatmul.bf16.gmra.mxu0 %v656
      %v719 = vpop.f32.mrf.mxu0
      %v720 = vadd.f32 0.0, %v719
      %v721 = vpop.f32.mrf.mxu0
      %v722 = vadd.f32 0.0, %v721
      %723 = vmatmul.bf16.gmra.mxu0 %v659
      %v724 = vpop.f32.mrf.mxu0
      %v725 = vadd.f32 0.0, %v724
      %v726 = vpop.f32.mrf.mxu0
      %v727 = vadd.f32 0.0, %v726
      %728 = vmatmul.bf16.gmra.mxu0 %v662
      %v729 = vpop.f32.mrf.mxu0
      %v730 = vadd.f32 0.0, %v729
      %v731 = vpop.f32.mrf.mxu0
      %v732 = vadd.f32 0.0, %v731
      %733 = vdwg.mxu0
      %v738 = vunpack.c.l.b16 %v587
      %v739 = vunpack.c.l.b16 %v588
      %v740 = vunpack.c.l.b16 %v589
      %v741 = vunpack.c.l.b16 %v590
      %v742 = vpack.c.b16 %v739, %v738
      %v743 = vpack.c.b16 %v741, %v740
      %746 = vmatpush.bf16.msra.mxu0 0
      %747 = vmatpush.bf16.msra.mxu0 0
      %748 = vmatpush.bf16.msra.mxu0 0
      %749 = vmatpush.bf16.msra.mxu0 0
      %750 = vmatpush.bf16.msra.mxu0 0
      %751 = vmatpush.bf16.msra.mxu0 0
      %752 = vmatpush.bf16.msra.mxu0 %v743
      %753 = vmatpush.bf16.msra.mxu0 %v742
      %754 = vmatmul.bf16.gmra.mxu0 %v653
      %v755 = vpop.f32.mrf.mxu0
      %v756 = vadd.f32 0.0, %v755
      %v757 = vpop.f32.mrf.mxu0
      %v758 = vadd.f32 0.0, %v757
      %759 = vmatmul.bf16.gmra.mxu0 %v656
      %v760 = vpop.f32.mrf.mxu0
      %v761 = vadd.f32 0.0, %v760
      %v762 = vpop.f32.mrf.mxu0
      %v763 = vadd.f32 0.0, %v762
      %764 = vmatmul.bf16.gmra.mxu0 %v659
      %v765 = vpop.f32.mrf.mxu0
      %v766 = vadd.f32 0.0, %v765
      %v767 = vpop.f32.mrf.mxu0
      %v768 = vadd.f32 0.0, %v767
      %769 = vmatmul.bf16.gmra.mxu0 %v662
      %v770 = vpop.f32.mrf.mxu0
      %v771 = vadd.f32 0.0, %v770
      %v772 = vpop.f32.mrf.mxu0
      %v773 = vadd.f32 0.0, %v772
      %774 = vdwg.mxu0
      %v779 = vunpack.c.l.b16 %v591
      %v780 = vunpack.c.l.b16 %v592
      %v781 = vunpack.c.l.b16 %v593
      %v782 = vunpack.c.l.b16 %v594
      %v783 = vpack.c.b16 %v780, %v779
      %v784 = vpack.c.b16 %v782, %v781
      %787 = vmatpush.bf16.msra.mxu0 0
      %788 = vmatpush.bf16.msra.mxu0 0
      %789 = vmatpush.bf16.msra.mxu0 0
      %790 = vmatpush.bf16.msra.mxu0 0
      %791 = vmatpush.bf16.msra.mxu0 0
      %792 = vmatpush.bf16.msra.mxu0 0
      %793 = vmatpush.bf16.msra.mxu0 %v784
      %794 = vmatpush.bf16.msra.mxu0 %v783
      %795 = vmatmul.bf16.gmra.mxu0 %v653
      %v796 = vpop.f32.mrf.mxu0
      %v797 = vadd.f32 0.0, %v796
      %v798 = vpop.f32.mrf.mxu0
      %v799 = vadd.f32 0.0, %v798
      %800 = vmatmul.bf16.gmra.mxu0 %v656
      %v801 = vpop.f32.mrf.mxu0
      %v802 = vadd.f32 0.0, %v801
      %v803 = vpop.f32.mrf.mxu0
      %v804 = vadd.f32 0.0, %v803
      %805 = vmatmul.bf16.gmra.mxu0 %v659
      %v806 = vpop.f32.mrf.mxu0
      %v807 = vadd.f32 0.0, %v806
      %v808 = vpop.f32.mrf.mxu0
      %v809 = vadd.f32 0.0, %v808
      %810 = vmatmul.bf16.gmra.mxu0 %v662
      %v811 = vpop.f32.mrf.mxu0
      %v812 = vadd.f32 0.0, %v811
      %v813 = vpop.f32.mrf.mxu0
      %v814 = vadd.f32 0.0, %v813
      %815 = vdwg.mxu0
      %v820 = vunpack.c.l.b16 %v595
      %v821 = vunpack.c.l.b16 %v596
      %v822 = vunpack.c.l.b16 %v597
      %v823 = vunpack.c.l.b16 %v598
      %v824 = vpack.c.b16 %v821, %v820
      %v825 = vpack.c.b16 %v823, %v822
      %828 = vmatpush.bf16.msra.mxu0 0
      %829 = vmatpush.bf16.msra.mxu0 0
      %830 = vmatpush.bf16.msra.mxu0 0
      %831 = vmatpush.bf16.msra.mxu0 0
      %832 = vmatpush.bf16.msra.mxu0 0
      %833 = vmatpush.bf16.msra.mxu0 0
      %834 = vmatpush.bf16.msra.mxu0 %v825
      %835 = vmatpush.bf16.msra.mxu0 %v824
      %836 = vmatmul.bf16.gmra.mxu0 %v653
      %v837 = vpop.f32.mrf.mxu0
      %v838 = vadd.f32 0.0, %v837
      %v839 = vpop.f32.mrf.mxu0
      %v840 = vadd.f32 0.0, %v839
      %841 = vmatmul.bf16.gmra.mxu0 %v656
      %v842 = vpop.f32.mrf.mxu0
      %v843 = vadd.f32 0.0, %v842
      %v844 = vpop.f32.mrf.mxu0
      %v845 = vadd.f32 0.0, %v844
      %846 = vmatmul.bf16.gmra.mxu0 %v659
      %v847 = vpop.f32.mrf.mxu0
      %v848 = vadd.f32 0.0, %v847
      %v849 = vpop.f32.mrf.mxu0
      %v850 = vadd.f32 0.0, %v849
      %851 = vmatmul.bf16.gmra.mxu0 %v662
      %v852 = vpop.f32.mrf.mxu0
      %v853 = vadd.f32 0.0, %v852
      %v854 = vpop.f32.mrf.mxu0
      %v855 = vadd.f32 0.0, %v854
      %856 = vdwg.mxu0
      %v861 = vunpack.c.l.b16 %v599
      %v862 = vunpack.c.l.b16 %v600
      %v863 = vunpack.c.l.b16 %v601
      %v864 = vunpack.c.l.b16 %v602
      %v865 = vpack.c.b16 %v862, %v861
      %v866 = vpack.c.b16 %v864, %v863
      %869 = vmatpush.bf16.msra.mxu0 0
      %870 = vmatpush.bf16.msra.mxu0 0
      %871 = vmatpush.bf16.msra.mxu0 0
      %872 = vmatpush.bf16.msra.mxu0 0
      %873 = vmatpush.bf16.msra.mxu0 0
      %874 = vmatpush.bf16.msra.mxu0 0
      %875 = vmatpush.bf16.msra.mxu0 %v866
      %876 = vmatpush.bf16.msra.mxu0 %v865
      %877 = vmatmul.bf16.gmra.mxu0 %v653
      %v878 = vpop.f32.mrf.mxu0
      %v879 = vadd.f32 0.0, %v878
      %v880 = vpop.f32.mrf.mxu0
      %v881 = vadd.f32 0.0, %v880
      %882 = vmatmul.bf16.gmra.mxu0 %v656
      %v883 = vpop.f32.mrf.mxu0
      %v884 = vadd.f32 0.0, %v883
      %v885 = vpop.f32.mrf.mxu0
      %v886 = vadd.f32 0.0, %v885
      %887 = vmatmul.bf16.gmra.mxu0 %v659
      %v888 = vpop.f32.mrf.mxu0
      %v889 = vadd.f32 0.0, %v888
      %v890 = vpop.f32.mrf.mxu0
      %v891 = vadd.f32 0.0, %v890
      %892 = vmatmul.bf16.gmra.mxu0 %v662
      %v893 = vpop.f32.mrf.mxu0
      %v894 = vadd.f32 0.0, %v893
      %v895 = vpop.f32.mrf.mxu0
      %v896 = vadd.f32 0.0, %v895
      %897 = vdwg.mxu0
      %v902 = vunpack.c.l.b16 %v603
      %v903 = vunpack.c.l.b16 %v604
      %v904 = vunpack.c.l.b16 %v605
      %v905 = vunpack.c.l.b16 %v606
      %v906 = vpack.c.b16 %v903, %v902
      %v907 = vpack.c.b16 %v905, %v904
      %910 = vmatpush.bf16.msra.mxu0 0
      %911 = vmatpush.bf16.msra.mxu0 0
      %912 = vmatpush.bf16.msra.mxu0 0
      %913 = vmatpush.bf16.msra.mxu0 0
      %914 = vmatpush.bf16.msra.mxu0 0
      %915 = vmatpush.bf16.msra.mxu0 0
      %916 = vmatpush.bf16.msra.mxu0 %v907
      %917 = vmatpush.bf16.msra.mxu0 %v906
      %918 = vmatmul.bf16.gmra.mxu0 %v653
      %v919 = vpop.f32.mrf.mxu0
      %v920 = vadd.f32 0.0, %v919
      %v921 = vpop.f32.mrf.mxu0
      %v922 = vadd.f32 0.0, %v921
      %923 = vmatmul.bf16.gmra.mxu0 %v656
      %v924 = vpop.f32.mrf.mxu0
      %v925 = vadd.f32 0.0, %v924
      %v926 = vpop.f32.mrf.mxu0
      %v927 = vadd.f32 0.0, %v926
      %928 = vmatmul.bf16.gmra.mxu0 %v659
      %v929 = vpop.f32.mrf.mxu0
      %v930 = vadd.f32 0.0, %v929
      %v931 = vpop.f32.mrf.mxu0
      %v932 = vadd.f32 0.0, %v931
      %933 = vmatmul.bf16.gmra.mxu0 %v662
      %v934 = vpop.f32.mrf.mxu0
      %v935 = vadd.f32 0.0, %v934
      %v936 = vpop.f32.mrf.mxu0
      %v937 = vadd.f32 0.0, %v936
      %938 = vdwg.mxu0
      %v943 = vunpack.c.l.b16 %v607
      %v944 = vunpack.c.l.b16 %v608
      %v945 = vunpack.c.l.b16 %v609
      %v946 = vunpack.c.l.b16 %v610
      %v947 = vpack.c.b16 %v944, %v943
      %v948 = vpack.c.b16 %v946, %v945
      %951 = vmatpush.bf16.msra.mxu0 0
      %952 = vmatpush.bf16.msra.mxu0 0
      %953 = vmatpush.bf16.msra.mxu0 0
      %954 = vmatpush.bf16.msra.mxu0 0
      %955 = vmatpush.bf16.msra.mxu0 0
      %956 = vmatpush.bf16.msra.mxu0 0
      %957 = vmatpush.bf16.msra.mxu0 %v948
      %958 = vmatpush.bf16.msra.mxu0 %v947
      %959 = vmatmul.bf16.gmra.mxu0 %v653
      %v960 = vpop.f32.mrf.mxu0
      %v961 = vadd.f32 0.0, %v960
      %v962 = vpop.f32.mrf.mxu0
      %v963 = vadd.f32 0.0, %v962
      %964 = vmatmul.bf16.gmra.mxu0 %v656
      %v965 = vpop.f32.mrf.mxu0
      %v966 = vadd.f32 0.0, %v965
      %v967 = vpop.f32.mrf.mxu0
      %v968 = vadd.f32 0.0, %v967
      %969 = vmatmul.bf16.gmra.mxu0 %v659
      %v970 = vpop.f32.mrf.mxu0
      %v971 = vadd.f32 0.0, %v970
      %v972 = vpop.f32.mrf.mxu0
      %v973 = vadd.f32 0.0, %v972
      %974 = vmatmul.bf16.gmra.mxu0 %v662
      %v975 = vpop.f32.mrf.mxu0
      %v976 = vadd.f32 0.0, %v975
      %v977 = vpop.f32.mrf.mxu0
      %v978 = vadd.f32 0.0, %v977
      %979 = vdwg.mxu0
      %v980 = vpack.c.bf16 %v674, %v674
      %v981 = vpack.c.bf16 %v676, %v676
      %v982 = vpack.c.bf16 %v679, %v679
      %v983 = vpack.c.bf16 %v681, %v681
      %v984 = vpack.c.bf16 %v684, %v684
      %v985 = vpack.c.bf16 %v686, %v686
      %v986 = vpack.c.bf16 %v689, %v689
      %v987 = vpack.c.bf16 %v691, %v691
      %v988 = vpack.c.bf16 %v715, %v715
      %v989 = vpack.c.bf16 %v717, %v717
      %v990 = vpack.c.bf16 %v720, %v720
      %v991 = vpack.c.bf16 %v722, %v722
      %v992 = vpack.c.bf16 %v725, %v725
      %v993 = vpack.c.bf16 %v727, %v727
      %v994 = vpack.c.bf16 %v730, %v730
      %v995 = vpack.c.bf16 %v732, %v732
      %v996 = vpack.c.bf16 %v756, %v756
      %v997 = vpack.c.bf16 %v758, %v758
      %v998 = vpack.c.bf16 %v761, %v761
      %v999 = vpack.c.bf16 %v763, %v763
      %v1000 = vpack.c.bf16 %v766, %v766
      %v1001 = vpack.c.bf16 %v768, %v768
      %v1002 = vpack.c.bf16 %v771, %v771
      %v1003 = vpack.c.bf16 %v773, %v773
      %v1004 = vpack.c.bf16 %v797, %v797
      %v1005 = vpack.c.bf16 %v799, %v799
      %v1006 = vpack.c.bf16 %v802, %v802
      %v1007 = vpack.c.bf16 %v804, %v804
      %v1008 = vpack.c.bf16 %v807, %v807
      %v1009 = vpack.c.bf16 %v809, %v809
      %v1010 = vpack.c.bf16 %v812, %v812
      %v1011 = vpack.c.bf16 %v814, %v814
      %v1012 = vpack.c.bf16 %v838, %v838
      %v1013 = vpack.c.bf16 %v840, %v840
      %v1014 = vpack.c.bf16 %v843, %v843
      %v1015 = vpack.c.bf16 %v845, %v845
      %v1016 = vpack.c.bf16 %v848, %v848
      %v1017 = vpack.c.bf16 %v850, %v850
      %v1018 = vpack.c.bf16 %v853, %v853
      %v1019 = vpack.c.bf16 %v855, %v855
      %v1020 = vpack.c.bf16 %v879, %v879
      %v1021 = vpack.c.bf16 %v881, %v881
      %v1022 = vpack.c.bf16 %v884, %v884
      %v1023 = vpack.c.bf16 %v886, %v886
      %v1024 = vpack.c.bf16 %v889, %v889
      %v1025 = vpack.c.bf16 %v891, %v891
      %v1026 = vpack.c.bf16 %v894, %v894
      %v1027 = vpack.c.bf16 %v896, %v896
      %v1028 = vpack.c.bf16 %v920, %v920
      %v1029 = vpack.c.bf16 %v922, %v922
      %v1030 = vpack.c.bf16 %v925, %v925
      %v1031 = vpack.c.bf16 %v927, %v927
      %v1032 = vpack.c.bf16 %v930, %v930
      %v1033 = vpack.c.bf16 %v932, %v932
      %v1034 = vpack.c.bf16 %v935, %v935
      %v1035 = vpack.c.bf16 %v937, %v937
      %v1036 = vpack.c.bf16 %v961, %v961
      %v1037 = vpack.c.bf16 %v963, %v963
      %v1038 = vpack.c.bf16 %v966, %v966
      %v1039 = vpack.c.bf16 %v968, %v968
      %v1040 = vpack.c.bf16 %v971, %v971
      %v1041 = vpack.c.bf16 %v973, %v973
      %v1042 = vpack.c.bf16 %v976, %v976
      %v1043 = vpack.c.bf16 %v978, %v978
      %v1044 = vrot.slane %v1012, 4
      %vm1045 = vcmask 1047556
      %v1046 = vsel %vm1045, %v1044, %v980
      %v1048 = vunpack.c.l.s4 1983009808
      %v1049 = vunpack.c.0.s8 %v1048
      %v1050 = vperm.slane %v1046, %v1049
      %v1051 = vrot.slane %v1028, 4
      %v1052 = vsel %vm1045, %v1051, %v996
      %v1054 = vunpack.c.l.s4 1983009808
      %v1055 = vunpack.c.0.s8 %v1054
      %v1056 = vperm.slane %v1052, %v1055
      %v1057 = vrot.slane %v1056, 4
      %v1058 = vsel %vm1045, %v1057, %v1050
      %v1059 = vrot.slane %v1050, 4
      %v1060 = vsel %vm1045, %v1056, %v1059
      %v1062 = vunpack.c.l.s4 1934713408
      %v1063 = vunpack.c.0.s8 %v1062
      %v1064 = vperm.slane %v1058, %v1063
      %v1066 = vunpack.c.l.s4 1934713408
      %v1067 = vunpack.c.0.s8 %v1066
      %v1068 = vperm.slane %v1060, %v1067
      %v1069 = vrot.slane %v1064, 4
      %v1070 = vsel %vm1045, 0, %v1069
      %v1071 = vrot.slane %v1068, 4
      %v1072 = vsel %vm1045, 0, %v1071
      %v1073 = vrot.slane %v1020, 4
      %v1074 = vsel %vm1045, %v1073, %v988
      %v1076 = vunpack.c.l.s4 1983009808
      %v1077 = vunpack.c.0.s8 %v1076
      %v1078 = vperm.slane %v1074, %v1077
      %v1079 = vrot.slane %v1036, 4
      %v1080 = vsel %vm1045, %v1079, %v1004
      %v1082 = vunpack.c.l.s4 1983009808
      %v1083 = vunpack.c.0.s8 %v1082
      %v1084 = vperm.slane %v1080, %v1083
      %v1085 = vrot.slane %v1084, 4
      %v1086 = vsel %vm1045, %v1085, %v1078
      %v1087 = vrot.slane %v1078, 4
      %v1088 = vsel %vm1045, %v1084, %v1087
      %v1090 = vunpack.c.l.s4 1934713408
      %v1091 = vunpack.c.0.s8 %v1090
      %v1092 = vperm.slane %v1086, %v1091
      %v1094 = vunpack.c.l.s4 1934713408
      %v1095 = vunpack.c.0.s8 %v1094
      %v1096 = vperm.slane %v1088, %v1095
      %v1097 = vrot.slane %v1092, 4
      %v1098 = vsel %vm1045, 0, %v1097
      %v1099 = vrot.slane %v1096, 4
      %v1100 = vsel %vm1045, 0, %v1099
      %v1101 = vrot.slane %v1013, 4
      %v1102 = vsel %vm1045, %v1101, %v981
      %v1104 = vunpack.c.l.s4 1983009808
      %v1105 = vunpack.c.0.s8 %v1104
      %v1106 = vperm.slane %v1102, %v1105
      %v1107 = vrot.slane %v1029, 4
      %v1108 = vsel %vm1045, %v1107, %v997
      %v1110 = vunpack.c.l.s4 1983009808
      %v1111 = vunpack.c.0.s8 %v1110
      %v1112 = vperm.slane %v1108, %v1111
      %v1113 = vrot.slane %v1112, 4
      %v1114 = vsel %vm1045, %v1113, %v1106
      %v1115 = vrot.slane %v1106, 4
      %v1116 = vsel %vm1045, %v1112, %v1115
      %v1118 = vunpack.c.l.s4 1934713408
      %v1119 = vunpack.c.0.s8 %v1118
      %v1120 = vperm.slane %v1114, %v1119
      %v1122 = vunpack.c.l.s4 1934713408
      %v1123 = vunpack.c.0.s8 %v1122
      %v1124 = vperm.slane %v1116, %v1123
      %v1125 = vrot.slane %v1120, 4
      %v1126 = vsel %vm1045, 0, %v1125
      %v1127 = vrot.slane %v1124, 4
      %v1128 = vsel %vm1045, 0, %v1127
      %v1129 = vrot.slane %v1021, 4
      %v1130 = vsel %vm1045, %v1129, %v989
      %v1132 = vunpack.c.l.s4 1983009808
      %v1133 = vunpack.c.0.s8 %v1132
      %v1134 = vperm.slane %v1130, %v1133
      %v1135 = vrot.slane %v1037, 4
      %v1136 = vsel %vm1045, %v1135, %v1005
      %v1138 = vunpack.c.l.s4 1983009808
      %v1139 = vunpack.c.0.s8 %v1138
      %v1140 = vperm.slane %v1136, %v1139
      %v1141 = vrot.slane %v1140, 4
      %v1142 = vsel %vm1045, %v1141, %v1134
      %v1143 = vrot.slane %v1134, 4
      %v1144 = vsel %vm1045, %v1140, %v1143
      %v1146 = vunpack.c.l.s4 1934713408
      %v1147 = vunpack.c.0.s8 %v1146
      %v1148 = vperm.slane %v1142, %v1147
      %v1150 = vunpack.c.l.s4 1934713408
      %v1151 = vunpack.c.0.s8 %v1150
      %v1152 = vperm.slane %v1144, %v1151
      %v1153 = vrot.slane %v1148, 4
      %v1154 = vsel %vm1045, 0, %v1153
      %v1155 = vrot.slane %v1152, 4
      %v1156 = vsel %vm1045, 0, %v1155
      %v1157 = vrot.slane %v1014, 4
      %v1158 = vsel %vm1045, %v1157, %v982
      %v1160 = vunpack.c.l.s4 1983009808
      %v1161 = vunpack.c.0.s8 %v1160
      %v1162 = vperm.slane %v1158, %v1161
      %v1163 = vrot.slane %v1030, 4
      %v1164 = vsel %vm1045, %v1163, %v998
      %v1166 = vunpack.c.l.s4 1983009808
      %v1167 = vunpack.c.0.s8 %v1166
      %v1168 = vperm.slane %v1164, %v1167
      %v1169 = vrot.slane %v1168, 4
      %v1170 = vsel %vm1045, %v1169, %v1162
      %v1171 = vrot.slane %v1162, 4
      %v1172 = vsel %vm1045, %v1168, %v1171
      %v1174 = vunpack.c.l.s4 1934713408
      %v1175 = vunpack.c.0.s8 %v1174
      %v1176 = vperm.slane %v1170, %v1175
      %v1178 = vunpack.c.l.s4 1934713408
      %v1179 = vunpack.c.0.s8 %v1178
      %v1180 = vperm.slane %v1172, %v1179
      %v1181 = vrot.slane %v1176, 4
      %v1182 = vsel %vm1045, 0, %v1181
      %v1183 = vrot.slane %v1180, 4
      %v1184 = vsel %vm1045, 0, %v1183
      %v1185 = vrot.slane %v1022, 4
      %v1186 = vsel %vm1045, %v1185, %v990
      %v1188 = vunpack.c.l.s4 1983009808
      %v1189 = vunpack.c.0.s8 %v1188
      %v1190 = vperm.slane %v1186, %v1189
      %v1191 = vrot.slane %v1038, 4
      %v1192 = vsel %vm1045, %v1191, %v1006
      %v1194 = vunpack.c.l.s4 1983009808
      %v1195 = vunpack.c.0.s8 %v1194
      %v1196 = vperm.slane %v1192, %v1195
      %v1197 = vrot.slane %v1196, 4
      %v1198 = vsel %vm1045, %v1197, %v1190
      %v1199 = vrot.slane %v1190, 4
      %v1200 = vsel %vm1045, %v1196, %v1199
      %v1202 = vunpack.c.l.s4 1934713408
      %v1203 = vunpack.c.0.s8 %v1202
      %v1204 = vperm.slane %v1198, %v1203
      %v1206 = vunpack.c.l.s4 1934713408
      %v1207 = vunpack.c.0.s8 %v1206
      %v1208 = vperm.slane %v1200, %v1207
      %v1209 = vrot.slane %v1204, 4
      %v1210 = vsel %vm1045, 0, %v1209
      %v1211 = vrot.slane %v1208, 4
      %v1212 = vsel %vm1045, 0, %v1211
      %v1213 = vrot.slane %v1015, 4
      %v1214 = vsel %vm1045, %v1213, %v983
      %v1216 = vunpack.c.l.s4 1983009808
      %v1217 = vunpack.c.0.s8 %v1216
      %v1218 = vperm.slane %v1214, %v1217
      %v1219 = vrot.slane %v1031, 4
      %v1220 = vsel %vm1045, %v1219, %v999
      %v1222 = vunpack.c.l.s4 1983009808
      %v1223 = vunpack.c.0.s8 %v1222
      %v1224 = vperm.slane %v1220, %v1223
      %v1225 = vrot.slane %v1224, 4
      %v1226 = vsel %vm1045, %v1225, %v1218
      %v1227 = vrot.slane %v1218, 4
      %v1228 = vsel %vm1045, %v1224, %v1227
      %v1230 = vunpack.c.l.s4 1934713408
      %v1231 = vunpack.c.0.s8 %v1230
      %v1232 = vperm.slane %v1226, %v1231
      %v1234 = vunpack.c.l.s4 1934713408
      %v1235 = vunpack.c.0.s8 %v1234
      %v1236 = vperm.slane %v1228, %v1235
      %v1237 = vrot.slane %v1232, 4
      %v1238 = vsel %vm1045, 0, %v1237
      %v1239 = vrot.slane %v1236, 4
      %v1240 = vsel %vm1045, 0, %v1239
      %v1241 = vrot.slane %v1023, 4
      %v1242 = vsel %vm1045, %v1241, %v991
      %v1244 = vunpack.c.l.s4 1983009808
      %v1245 = vunpack.c.0.s8 %v1244
      %v1246 = vperm.slane %v1242, %v1245
      %v1247 = vrot.slane %v1039, 4
      %v1248 = vsel %vm1045, %v1247, %v1007
      %v1250 = vunpack.c.l.s4 1983009808
      %v1251 = vunpack.c.0.s8 %v1250
      %v1252 = vperm.slane %v1248, %v1251
      %v1253 = vrot.slane %v1252, 4
      %v1254 = vsel %vm1045, %v1253, %v1246
      %v1255 = vrot.slane %v1246, 4
      %v1256 = vsel %vm1045, %v1252, %v1255
      %v1258 = vunpack.c.l.s4 1934713408
      %v1259 = vunpack.c.0.s8 %v1258
      %v1260 = vperm.slane %v1254, %v1259
      %v1262 = vunpack.c.l.s4 1934713408
      %v1263 = vunpack.c.0.s8 %v1262
      %v1264 = vperm.slane %v1256, %v1263
      %v1265 = vrot.slane %v1260, 4
      %v1266 = vsel %vm1045, 0, %v1265
      %v1267 = vrot.slane %v1264, 4
      %v1268 = vsel %vm1045, 0, %v1267
      %v1269 = vrot.slane %v1016, 4
      %v1270 = vsel %vm1045, %v1269, %v984
      %v1272 = vunpack.c.l.s4 1983009808
      %v1273 = vunpack.c.0.s8 %v1272
      %v1274 = vperm.slane %v1270, %v1273
      %v1275 = vrot.slane %v1032, 4
      %v1276 = vsel %vm1045, %v1275, %v1000
      %v1278 = vunpack.c.l.s4 1983009808
      %v1279 = vunpack.c.0.s8 %v1278
      %v1280 = vperm.slane %v1276, %v1279
      %v1281 = vrot.slane %v1280, 4
      %v1282 = vsel %vm1045, %v1281, %v1274
      %v1283 = vrot.slane %v1274, 4
      %v1284 = vsel %vm1045, %v1280, %v1283
      %v1286 = vunpack.c.l.s4 1934713408
      %v1287 = vunpack.c.0.s8 %v1286
      %v1288 = vperm.slane %v1282, %v1287
      %v1290 = vunpack.c.l.s4 1934713408
      %v1291 = vunpack.c.0.s8 %v1290
      %v1292 = vperm.slane %v1284, %v1291
      %v1293 = vrot.slane %v1288, 4
      %v1294 = vsel %vm1045, 0, %v1293
      %v1295 = vrot.slane %v1292, 4
      %v1296 = vsel %vm1045, 0, %v1295
      %v1297 = vrot.slane %v1024, 4
      %v1298 = vsel %vm1045, %v1297, %v992
      %v1300 = vunpack.c.l.s4 1983009808
      %v1301 = vunpack.c.0.s8 %v1300
      %v1302 = vperm.slane %v1298, %v1301
      %v1303 = vrot.slane %v1040, 4
      %v1304 = vsel %vm1045, %v1303, %v1008
      %v1306 = vunpack.c.l.s4 1983009808
      %v1307 = vunpack.c.0.s8 %v1306
      %v1308 = vperm.slane %v1304, %v1307
      %v1309 = vrot.slane %v1308, 4
      %v1310 = vsel %vm1045, %v1309, %v1302
      %v1311 = vrot.slane %v1302, 4
      %v1312 = vsel %vm1045, %v1308, %v1311
      %v1314 = vunpack.c.l.s4 1934713408
      %v1315 = vunpack.c.0.s8 %v1314
      %v1316 = vperm.slane %v1310, %v1315
      %v1318 = vunpack.c.l.s4 1934713408
      %v1319 = vunpack.c.0.s8 %v1318
      %v1320 = vperm.slane %v1312, %v1319
      %v1321 = vrot.slane %v1316, 4
      %v1322 = vsel %vm1045, 0, %v1321
      %v1323 = vrot.slane %v1320, 4
      %v1324 = vsel %vm1045, 0, %v1323
      %v1325 = vrot.slane %v1017, 4
      %v1326 = vsel %vm1045, %v1325, %v985
      %v1328 = vunpack.c.l.s4 1983009808
      %v1329 = vunpack.c.0.s8 %v1328
      %v1330 = vperm.slane %v1326, %v1329
      %v1331 = vrot.slane %v1033, 4
      %v1332 = vsel %vm1045, %v1331, %v1001
      %v1334 = vunpack.c.l.s4 1983009808
      %v1335 = vunpack.c.0.s8 %v1334
      %v1336 = vperm.slane %v1332, %v1335
      %v1337 = vrot.slane %v1336, 4
      %v1338 = vsel %vm1045, %v1337, %v1330
      %v1339 = vrot.slane %v1330, 4
      %v1340 = vsel %vm1045, %v1336, %v1339
      %v1342 = vunpack.c.l.s4 1934713408
      %v1343 = vunpack.c.0.s8 %v1342
      %v1344 = vperm.slane %v1338, %v1343
      %v1346 = vunpack.c.l.s4 1934713408
      %v1347 = vunpack.c.0.s8 %v1346
      %v1348 = vperm.slane %v1340, %v1347
      %v1349 = vrot.slane %v1344, 4
      %v1350 = vsel %vm1045, 0, %v1349
      %v1351 = vrot.slane %v1348, 4
      %v1352 = vsel %vm1045, 0, %v1351
      %v1353 = vrot.slane %v1025, 4
      %v1354 = vsel %vm1045, %v1353, %v993
      %v1356 = vunpack.c.l.s4 1983009808
      %v1357 = vunpack.c.0.s8 %v1356
      %v1358 = vperm.slane %v1354, %v1357
      %v1359 = vrot.slane %v1041, 4
      %v1360 = vsel %vm1045, %v1359, %v1009
      %v1362 = vunpack.c.l.s4 1983009808
      %v1363 = vunpack.c.0.s8 %v1362
      %v1364 = vperm.slane %v1360, %v1363
      %v1365 = vrot.slane %v1364, 4
      %v1366 = vsel %vm1045, %v1365, %v1358
      %v1367 = vrot.slane %v1358, 4
      %v1368 = vsel %vm1045, %v1364, %v1367
      %v1370 = vunpack.c.l.s4 1934713408
      %v1371 = vunpack.c.0.s8 %v1370
      %v1372 = vperm.slane %v1366, %v1371
      %v1374 = vunpack.c.l.s4 1934713408
      %v1375 = vunpack.c.0.s8 %v1374
      %v1376 = vperm.slane %v1368, %v1375
      %v1377 = vrot.slane %v1372, 4
      %v1378 = vsel %vm1045, 0, %v1377
      %v1379 = vrot.slane %v1376, 4
      %v1380 = vsel %vm1045, 0, %v1379
      %v1381 = vrot.slane %v1018, 4
      %v1382 = vsel %vm1045, %v1381, %v986
      %v1384 = vunpack.c.l.s4 1983009808
      %v1385 = vunpack.c.0.s8 %v1384
      %v1386 = vperm.slane %v1382, %v1385
      %v1387 = vrot.slane %v1034, 4
      %v1388 = vsel %vm1045, %v1387, %v1002
      %v1390 = vunpack.c.l.s4 1983009808
      %v1391 = vunpack.c.0.s8 %v1390
      %v1392 = vperm.slane %v1388, %v1391
      %v1393 = vrot.slane %v1392, 4
      %v1394 = vsel %vm1045, %v1393, %v1386
      %v1395 = vrot.slane %v1386, 4
      %v1396 = vsel %vm1045, %v1392, %v1395
      %v1398 = vunpack.c.l.s4 1934713408
      %v1399 = vunpack.c.0.s8 %v1398
      %v1400 = vperm.slane %v1394, %v1399
      %v1402 = vunpack.c.l.s4 1934713408
      %v1403 = vunpack.c.0.s8 %v1402
      %v1404 = vperm.slane %v1396, %v1403
      %v1405 = vrot.slane %v1400, 4
      %v1406 = vsel %vm1045, 0, %v1405
      %v1407 = vrot.slane %v1404, 4
      %v1408 = vsel %vm1045, 0, %v1407
      %v1409 = vrot.slane %v1026, 4
      %v1410 = vsel %vm1045, %v1409, %v994
      %v1412 = vunpack.c.l.s4 1983009808
      %v1413 = vunpack.c.0.s8 %v1412
      %v1414 = vperm.slane %v1410, %v1413
      %v1415 = vrot.slane %v1042, 4
      %v1416 = vsel %vm1045, %v1415, %v1010
      %v1418 = vunpack.c.l.s4 1983009808
      %v1419 = vunpack.c.0.s8 %v1418
      %v1420 = vperm.slane %v1416, %v1419
      %v1421 = vrot.slane %v1420, 4
      %v1422 = vsel %vm1045, %v1421, %v1414
      %v1423 = vrot.slane %v1414, 4
      %v1424 = vsel %vm1045, %v1420, %v1423
      %v1426 = vunpack.c.l.s4 1934713408
      %v1427 = vunpack.c.0.s8 %v1426
      %v1428 = vperm.slane %v1422, %v1427
      %v1430 = vunpack.c.l.s4 1934713408
      %v1431 = vunpack.c.0.s8 %v1430
      %v1432 = vperm.slane %v1424, %v1431
      %v1433 = vrot.slane %v1428, 4
      %v1434 = vsel %vm1045, 0, %v1433
      %v1435 = vrot.slane %v1432, 4
      %v1436 = vsel %vm1045, 0, %v1435
      %v1437 = vrot.slane %v1019, 4
      %v1438 = vsel %vm1045, %v1437, %v987
      %v1440 = vunpack.c.l.s4 1983009808
      %v1441 = vunpack.c.0.s8 %v1440
      %v1442 = vperm.slane %v1438, %v1441
      %v1443 = vrot.slane %v1035, 4
      %v1444 = vsel %vm1045, %v1443, %v1003
      %v1446 = vunpack.c.l.s4 1983009808
      %v1447 = vunpack.c.0.s8 %v1446
      %v1448 = vperm.slane %v1444, %v1447
      %v1449 = vrot.slane %v1448, 4
      %v1450 = vsel %vm1045, %v1449, %v1442
      %v1451 = vrot.slane %v1442, 4
      %v1452 = vsel %vm1045, %v1448, %v1451
      %v1454 = vunpack.c.l.s4 1934713408
      %v1455 = vunpack.c.0.s8 %v1454
      %v1456 = vperm.slane %v1450, %v1455
      %v1458 = vunpack.c.l.s4 1934713408
      %v1459 = vunpack.c.0.s8 %v1458
      %v1460 = vperm.slane %v1452, %v1459
      %v1461 = vrot.slane %v1456, 4
      %v1462 = vsel %vm1045, 0, %v1461
      %v1463 = vrot.slane %v1460, 4
      %v1464 = vsel %vm1045, 0, %v1463
      %v1465 = vrot.slane %v1027, 4
      %v1466 = vsel %vm1045, %v1465, %v995
      %v1468 = vunpack.c.l.s4 1983009808
      %v1469 = vunpack.c.0.s8 %v1468
      %v1470 = vperm.slane %v1466, %v1469
      %v1471 = vrot.slane %v1043, 4
      %v1472 = vsel %vm1045, %v1471, %v1011
      %v1474 = vunpack.c.l.s4 1983009808
      %v1475 = vunpack.c.0.s8 %v1474
      %v1476 = vperm.slane %v1472, %v1475
      %v1477 = vrot.slane %v1476, 4
      %v1478 = vsel %vm1045, %v1477, %v1470
      %v1479 = vrot.slane %v1470, 4
      %v1480 = vsel %vm1045, %v1476, %v1479
      %v1482 = vunpack.c.l.s4 1934713408
      %v1483 = vunpack.c.0.s8 %v1482
      %v1484 = vperm.slane %v1478, %v1483
      %v1486 = vunpack.c.l.s4 1934713408
      %v1487 = vunpack.c.0.s8 %v1486
      %v1488 = vperm.slane %v1480, %v1487
      %v1489 = vrot.slane %v1484, 4
      %v1490 = vsel %vm1045, 0, %v1489
      %v1491 = vrot.slane %v1488, 4
      %v1492 = vsel %vm1045, 0, %v1491
      %v1495 = vpack.i.b16 %v1092, %v1064
      %v1496 = vshrl.u32 %v1064, 16
      %v1497 = vshrl.u32 %v1092, 16
      %v1498 = vpack.i.b16 %v1497, %v1496
      %v1501 = vpack.i.b16 %v1098, %v1070
      %v1502 = vshrl.u32 %v1070, 16
      %v1503 = vshrl.u32 %v1098, 16
      %v1504 = vpack.i.b16 %v1503, %v1502
      %v1507 = vpack.i.b16 %v1096, %v1068
      %v1508 = vshrl.u32 %v1068, 16
      %v1509 = vshrl.u32 %v1096, 16
      %v1510 = vpack.i.b16 %v1509, %v1508
      %v1513 = vpack.i.b16 %v1100, %v1072
      %v1514 = vshrl.u32 %v1072, 16
      %v1515 = vshrl.u32 %v1100, 16
      %v1516 = vpack.i.b16 %v1515, %v1514
      %v1519 = vpack.i.b16 %v1148, %v1120
      %v1520 = vshrl.u32 %v1120, 16
      %v1521 = vshrl.u32 %v1148, 16
      %v1522 = vpack.i.b16 %v1521, %v1520
      %v1525 = vpack.i.b16 %v1154, %v1126
      %v1526 = vshrl.u32 %v1126, 16
      %v1527 = vshrl.u32 %v1154, 16
      %v1528 = vpack.i.b16 %v1527, %v1526
      %v1531 = vpack.i.b16 %v1152, %v1124
      %v1532 = vshrl.u32 %v1124, 16
      %v1533 = vshrl.u32 %v1152, 16
      %v1534 = vpack.i.b16 %v1533, %v1532
      %v1537 = vpack.i.b16 %v1156, %v1128
      %v1538 = vshrl.u32 %v1128, 16
      %v1539 = vshrl.u32 %v1156, 16
      %v1540 = vpack.i.b16 %v1539, %v1538
      %v1543 = vpack.i.b16 %v1204, %v1176
      %v1544 = vshrl.u32 %v1176, 16
      %v1545 = vshrl.u32 %v1204, 16
      %v1546 = vpack.i.b16 %v1545, %v1544
      %v1549 = vpack.i.b16 %v1210, %v1182
      %v1550 = vshrl.u32 %v1182, 16
      %v1551 = vshrl.u32 %v1210, 16
      %v1552 = vpack.i.b16 %v1551, %v1550
      %v1555 = vpack.i.b16 %v1208, %v1180
      %v1556 = vshrl.u32 %v1180, 16
      %v1557 = vshrl.u32 %v1208, 16
      %v1558 = vpack.i.b16 %v1557, %v1556
      %v1561 = vpack.i.b16 %v1212, %v1184
      %v1562 = vshrl.u32 %v1184, 16
      %v1563 = vshrl.u32 %v1212, 16
      %v1564 = vpack.i.b16 %v1563, %v1562
      %v1567 = vpack.i.b16 %v1260, %v1232
      %v1568 = vshrl.u32 %v1232, 16
      %v1569 = vshrl.u32 %v1260, 16
      %v1570 = vpack.i.b16 %v1569, %v1568
      %v1573 = vpack.i.b16 %v1266, %v1238
      %v1574 = vshrl.u32 %v1238, 16
      %v1575 = vshrl.u32 %v1266, 16
      %v1576 = vpack.i.b16 %v1575, %v1574
      %v1579 = vpack.i.b16 %v1264, %v1236
      %v1580 = vshrl.u32 %v1236, 16
      %v1581 = vshrl.u32 %v1264, 16
      %v1582 = vpack.i.b16 %v1581, %v1580
      %v1585 = vpack.i.b16 %v1268, %v1240
      %v1586 = vshrl.u32 %v1240, 16
      %v1587 = vshrl.u32 %v1268, 16
      %v1588 = vpack.i.b16 %v1587, %v1586
      %v1591 = vpack.i.b16 %v1316, %v1288
      %v1592 = vshrl.u32 %v1288, 16
      %v1593 = vshrl.u32 %v1316, 16
      %v1594 = vpack.i.b16 %v1593, %v1592
      %v1597 = vpack.i.b16 %v1322, %v1294
      %v1598 = vshrl.u32 %v1294, 16
      %v1599 = vshrl.u32 %v1322, 16
      %v1600 = vpack.i.b16 %v1599, %v1598
      %v1603 = vpack.i.b16 %v1320, %v1292
      %v1604 = vshrl.u32 %v1292, 16
      %v1605 = vshrl.u32 %v1320, 16
      %v1606 = vpack.i.b16 %v1605, %v1604
      %v1609 = vpack.i.b16 %v1324, %v1296
      %v1610 = vshrl.u32 %v1296, 16
      %v1611 = vshrl.u32 %v1324, 16
      %v1612 = vpack.i.b16 %v1611, %v1610
      %v1615 = vpack.i.b16 %v1372, %v1344
      %v1616 = vshrl.u32 %v1344, 16
      %v1617 = vshrl.u32 %v1372, 16
      %v1618 = vpack.i.b16 %v1617, %v1616
      %v1621 = vpack.i.b16 %v1378, %v1350
      %v1622 = vshrl.u32 %v1350, 16
      %v1623 = vshrl.u32 %v1378, 16
      %v1624 = vpack.i.b16 %v1623, %v1622
      %v1627 = vpack.i.b16 %v1376, %v1348
      %v1628 = vshrl.u32 %v1348, 16
      %v1629 = vshrl.u32 %v1376, 16
      %v1630 = vpack.i.b16 %v1629, %v1628
      %v1633 = vpack.i.b16 %v1380, %v1352
      %v1634 = vshrl.u32 %v1352, 16
      %v1635 = vshrl.u32 %v1380, 16
      %v1636 = vpack.i.b16 %v1635, %v1634
      %v1639 = vpack.i.b16 %v1428, %v1400
      %v1640 = vshrl.u32 %v1400, 16
      %v1641 = vshrl.u32 %v1428, 16
      %v1642 = vpack.i.b16 %v1641, %v1640
      %v1645 = vpack.i.b16 %v1434, %v1406
      %v1646 = vshrl.u32 %v1406, 16
      %v1647 = vshrl.u32 %v1434, 16
      %v1648 = vpack.i.b16 %v1647, %v1646
      %v1651 = vpack.i.b16 %v1432, %v1404
      %v1652 = vshrl.u32 %v1404, 16
      %v1653 = vshrl.u32 %v1432, 16
      %v1654 = vpack.i.b16 %v1653, %v1652
      %v1657 = vpack.i.b16 %v1436, %v1408
      %v1658 = vshrl.u32 %v1408, 16
      %v1659 = vshrl.u32 %v1436, 16
      %v1660 = vpack.i.b16 %v1659, %v1658
      %v1663 = vpack.i.b16 %v1484, %v1456
      %v1664 = vshrl.u32 %v1456, 16
      %v1665 = vshrl.u32 %v1484, 16
      %v1666 = vpack.i.b16 %v1665, %v1664
      %v1669 = vpack.i.b16 %v1490, %v1462
      %v1670 = vshrl.u32 %v1462, 16
      %v1671 = vshrl.u32 %v1490, 16
      %v1672 = vpack.i.b16 %v1671, %v1670
      %v1675 = vpack.i.b16 %v1488, %v1460
      %v1676 = vshrl.u32 %v1460, 16
      %v1677 = vshrl.u32 %v1488, 16
      %v1678 = vpack.i.b16 %v1677, %v1676
      %v1681 = vpack.i.b16 %v1492, %v1464
      %v1682 = vshrl.u32 %v1464, 16
      %v1683 = vshrl.u32 %v1492, 16
      %v1684 = vpack.i.b16 %v1683, %v1682
      %v1685 = vunpack.c.l.b16 %v1498
      %v1686 = vpack.c.b16 %v1685, %v1685
      %1687 = vrot.lane.b32.xlu0 %v1686, 64
      %v1688 = vpop.permute.xlu0 %1687
      %v1689 = vunpack.c.l.b16 %v1504
      %v1690 = vpack.c.b16 %v1689, %v1689
      %1691 = vrot.lane.b32.xlu0 %v1690, 64
      %v1692 = vpop.permute.xlu0 %1691
      %v1693 = vunpack.c.l.b16 %v1510
      %v1694 = vpack.c.b16 %v1693, %v1693
      %1695 = vrot.lane.b32.xlu0 %v1694, 64
      %v1696 = vpop.permute.xlu0 %1695
      %v1697 = vunpack.c.l.b16 %v1516
      %v1698 = vpack.c.b16 %v1697, %v1697
      %1699 = vrot.lane.b32.xlu0 %v1698, 64
      %v1700 = vpop.permute.xlu0 %1699
      %v1701 = vunpack.c.l.b16 %v1522
      %v1702 = vpack.c.b16 %v1701, %v1701
      %1703 = vrot.lane.b32.xlu0 %v1702, 64
      %v1704 = vpop.permute.xlu0 %1703
      %v1705 = vunpack.c.l.b16 %v1528
      %v1706 = vpack.c.b16 %v1705, %v1705
      %1707 = vrot.lane.b32.xlu0 %v1706, 64
      %v1708 = vpop.permute.xlu0 %1707
      %v1709 = vunpack.c.l.b16 %v1534
      %v1710 = vpack.c.b16 %v1709, %v1709
      %1711 = vrot.lane.b32.xlu0 %v1710, 64
      %v1712 = vpop.permute.xlu0 %1711
      %v1713 = vunpack.c.l.b16 %v1540
      %v1714 = vpack.c.b16 %v1713, %v1713
      %1715 = vrot.lane.b32.xlu0 %v1714, 64
      %v1716 = vpop.permute.xlu0 %1715
      %v1717 = vunpack.c.l.b16 %v1546
      %v1718 = vpack.c.b16 %v1717, %v1717
      %1719 = vrot.lane.b32.xlu0 %v1718, 64
      %v1720 = vpop.permute.xlu0 %1719
      %v1721 = vunpack.c.l.b16 %v1552
      %v1722 = vpack.c.b16 %v1721, %v1721
      %1723 = vrot.lane.b32.xlu0 %v1722, 64
      %v1724 = vpop.permute.xlu0 %1723
      %v1725 = vunpack.c.l.b16 %v1558
      %v1726 = vpack.c.b16 %v1725, %v1725
      %1727 = vrot.lane.b32.xlu0 %v1726, 64
      %v1728 = vpop.permute.xlu0 %1727
      %v1729 = vunpack.c.l.b16 %v1564
      %v1730 = vpack.c.b16 %v1729, %v1729
      %1731 = vrot.lane.b32.xlu0 %v1730, 64
      %v1732 = vpop.permute.xlu0 %1731
      %v1733 = vunpack.c.l.b16 %v1570
      %v1734 = vpack.c.b16 %v1733, %v1733
      %1735 = vrot.lane.b32.xlu0 %v1734, 64
      %v1736 = vpop.permute.xlu0 %1735
      %v1737 = vunpack.c.l.b16 %v1576
      %v1738 = vpack.c.b16 %v1737, %v1737
      %1739 = vrot.lane.b32.xlu0 %v1738, 64
      %v1740 = vpop.permute.xlu0 %1739
      %v1741 = vunpack.c.l.b16 %v1582
      %v1742 = vpack.c.b16 %v1741, %v1741
      %1743 = vrot.lane.b32.xlu0 %v1742, 64
      %v1744 = vpop.permute.xlu0 %1743
      %v1745 = vunpack.c.l.b16 %v1588
      %v1746 = vpack.c.b16 %v1745, %v1745
      %1747 = vrot.lane.b32.xlu0 %v1746, 64
      %v1748 = vpop.permute.xlu0 %1747
      %v1749 = vunpack.c.l.b16 %v1594
      %v1750 = vpack.c.b16 %v1749, %v1749
      %1751 = vrot.lane.b32.xlu0 %v1750, 64
      %v1752 = vpop.permute.xlu0 %1751
      %v1753 = vunpack.c.l.b16 %v1600
      %v1754 = vpack.c.b16 %v1753, %v1753
      %1755 = vrot.lane.b32.xlu0 %v1754, 64
      %v1756 = vpop.permute.xlu0 %1755
      %v1757 = vunpack.c.l.b16 %v1606
      %v1758 = vpack.c.b16 %v1757, %v1757
      %1759 = vrot.lane.b32.xlu0 %v1758, 64
      %v1760 = vpop.permute.xlu0 %1759
      %v1761 = vunpack.c.l.b16 %v1612
      %v1762 = vpack.c.b16 %v1761, %v1761
      %1763 = vrot.lane.b32.xlu0 %v1762, 64
      %v1764 = vpop.permute.xlu0 %1763
      %v1765 = vunpack.c.l.b16 %v1618
      %v1766 = vpack.c.b16 %v1765, %v1765
      %1767 = vrot.lane.b32.xlu0 %v1766, 64
      %v1768 = vpop.permute.xlu0 %1767
      %v1769 = vunpack.c.l.b16 %v1624
      %v1770 = vpack.c.b16 %v1769, %v1769
      %1771 = vrot.lane.b32.xlu0 %v1770, 64
      %v1772 = vpop.permute.xlu0 %1771
      %v1773 = vunpack.c.l.b16 %v1630
      %v1774 = vpack.c.b16 %v1773, %v1773
      %1775 = vrot.lane.b32.xlu0 %v1774, 64
      %v1776 = vpop.permute.xlu0 %1775
      %v1777 = vunpack.c.l.b16 %v1636
      %v1778 = vpack.c.b16 %v1777, %v1777
      %1779 = vrot.lane.b32.xlu0 %v1778, 64
      %v1780 = vpop.permute.xlu0 %1779
      %v1781 = vunpack.c.l.b16 %v1642
      %v1782 = vpack.c.b16 %v1781, %v1781
      %1783 = vrot.lane.b32.xlu0 %v1782, 64
      %v1784 = vpop.permute.xlu0 %1783
      %v1785 = vunpack.c.l.b16 %v1648
      %v1786 = vpack.c.b16 %v1785, %v1785
      %1787 = vrot.lane.b32.xlu0 %v1786, 64
      %v1788 = vpop.permute.xlu0 %1787
      %v1789 = vunpack.c.l.b16 %v1654
      %v1790 = vpack.c.b16 %v1789, %v1789
      %1791 = vrot.lane.b32.xlu0 %v1790, 64
      %v1792 = vpop.permute.xlu0 %1791
      %v1793 = vunpack.c.l.b16 %v1660
      %v1794 = vpack.c.b16 %v1793, %v1793
      %1795 = vrot.lane.b32.xlu0 %v1794, 64
      %v1796 = vpop.permute.xlu0 %1795
      %v1797 = vunpack.c.l.b16 %v1666
      %v1798 = vpack.c.b16 %v1797, %v1797
      %1799 = vrot.lane.b32.xlu0 %v1798, 64
      %v1800 = vpop.permute.xlu0 %1799
      %v1801 = vunpack.c.l.b16 %v1672
      %v1802 = vpack.c.b16 %v1801, %v1801
      %1803 = vrot.lane.b32.xlu0 %v1802, 64
      %v1804 = vpop.permute.xlu0 %1803
      %v1805 = vunpack.c.l.b16 %v1678
      %v1806 = vpack.c.b16 %v1805, %v1805
      %1807 = vrot.lane.b32.xlu0 %v1806, 64
      %v1808 = vpop.permute.xlu0 %1807
      %v1809 = vunpack.c.l.b16 %v1684
      %v1810 = vpack.c.b16 %v1809, %v1809
      %1811 = vrot.lane.b32.xlu0 %v1810, 64
      %v1812 = vpop.permute.xlu0 %1811
      %vm1813 = vcmask 523264
      %v1816 = vsel %vm1813, %v1495, %v1688
      %v1819 = vsel %vm1813, %v1501, %v1692
      %v1822 = vsel %vm1813, %v1507, %v1696
      %v1825 = vsel %vm1813, %v1513, %v1700
      %v1828 = vsel %vm1813, %v1519, %v1704
      %v1831 = vsel %vm1813, %v1525, %v1708
      %v1834 = vsel %vm1813, %v1531, %v1712
      %v1837 = vsel %vm1813, %v1537, %v1716
      %v1840 = vsel %vm1813, %v1543, %v1720
      %v1843 = vsel %vm1813, %v1549, %v1724
      %v1846 = vsel %vm1813, %v1555, %v1728
      %v1849 = vsel %vm1813, %v1561, %v1732
      %v1852 = vsel %vm1813, %v1567, %v1736
      %v1855 = vsel %vm1813, %v1573, %v1740
      %v1858 = vsel %vm1813, %v1579, %v1744
      %v1861 = vsel %vm1813, %v1585, %v1748
      %v1864 = vsel %vm1813, %v1591, %v1752
      %v1867 = vsel %vm1813, %v1597, %v1756
      %v1870 = vsel %vm1813, %v1603, %v1760
      %v1873 = vsel %vm1813, %v1609, %v1764
      %v1876 = vsel %vm1813, %v1615, %v1768
      %v1879 = vsel %vm1813, %v1621, %v1772
      %v1882 = vsel %vm1813, %v1627, %v1776
      %v1885 = vsel %vm1813, %v1633, %v1780
      %v1888 = vsel %vm1813, %v1639, %v1784
      %v1891 = vsel %vm1813, %v1645, %v1788
      %v1894 = vsel %vm1813, %v1651, %v1792
      %v1897 = vsel %vm1813, %v1657, %v1796
      %v1900 = vsel %vm1813, %v1663, %v1800
      %v1903 = vsel %vm1813, %v1669, %v1804
      %v1906 = vsel %vm1813, %v1675, %v1808
      %v1909 = vsel %vm1813, %v1681, %v1812
      %v1910 = vld [vmem:[%s3] sm:$0xf]
      %v1911 = vld [vmem:[%s3 + $0x4] sm:$0xf]
      %v1914 = vunpack.c.l.b16 %v1910
      %v1915 = vunpack.c.l.b16 %v1911
      %v1916 = vpack.c.b16 %v1915, %v1914
      %vm1917 = vcmask 64512
      %v1919 = vsel %vm1917, %v1916, 0
      %vm1921 = vcmask 1043456
      %v1922 = vsel %vm1921, %v1816, 0
      %v1924 = vsel %vm1921, %v1819, 0
      %v1926 = vsel %vm1921, %v1822, 0
      %v1928 = vsel %vm1921, %v1825, 0
      %v1930 = vsel %vm1921, %v1828, 0
      %v1932 = vsel %vm1921, %v1831, 0
      %v1934 = vsel %vm1921, %v1834, 0
      %v1936 = vsel %vm1921, %v1837, 0
      %v1938 = vsel %vm1921, %v1840, 0
      %v1940 = vsel %vm1921, %v1843, 0
      %v1942 = vsel %vm1921, %v1846, 0
      %v1944 = vsel %vm1921, %v1849, 0
      %v1946 = vsel %vm1921, %v1852, 0
      %v1948 = vsel %vm1921, %v1855, 0
      %v1950 = vsel %vm1921, %v1858, 0
      %v1952 = vsel %vm1921, %v1861, 0
      %v1954 = vsel %vm1921, %v1864, 0
      %v1956 = vsel %vm1921, %v1867, 0
      %v1958 = vsel %vm1921, %v1870, 0
      %v1960 = vsel %vm1921, %v1873, 0
      %v1962 = vsel %vm1921, %v1876, 0
      %v1964 = vsel %vm1921, %v1879, 0
      %v1966 = vsel %vm1921, %v1882, 0
      %v1968 = vsel %vm1921, %v1885, 0
      %v1970 = vsel %vm1921, %v1888, 0
      %v1972 = vsel %vm1921, %v1891, 0
      %v1974 = vsel %vm1921, %v1894, 0
      %v1976 = vsel %vm1921, %v1897, 0
      %v1978 = vsel %vm1921, %v1900, 0
      %v1980 = vsel %vm1921, %v1903, 0
      %v1982 = vsel %vm1921, %v1906, 0
      %v1984 = vsel %vm1921, %v1909, 0
      %1986 = vmatpush.bf16.msra.mxu0 0
      %1987 = vmatpush.bf16.msra.mxu0 0
      %1988 = vmatpush.bf16.msra.mxu0 0
      %1989 = vmatpush.bf16.msra.mxu0 0
      %1990 = vmatpush.bf16.msra.mxu0 0
      %1991 = vmatpush.bf16.msra.mxu0 0
      %1992 = vmatpush.bf16.msra.mxu0 0
      %1993 = vmatpush.bf16.msra.mxu0 %v1922
      %1994 = vmatmul.bf16.gmra.mxu0 %v1919
      %v1995 = vpop.f32.mrf.mxu0
      %v1996 = vadd.f32 0.0, %v1995
      %v1997 = vpop.f32.mrf.mxu0
      %v1998 = vadd.f32 0.0, %v1997
      %1999 = vdwg.mxu0
      %2000 = vmatpush.bf16.msra.mxu0 0
      %2001 = vmatpush.bf16.msra.mxu0 0
      %2002 = vmatpush.bf16.msra.mxu0 0
      %2003 = vmatpush.bf16.msra.mxu0 0
      %2004 = vmatpush.bf16.msra.mxu0 0
      %2005 = vmatpush.bf16.msra.mxu0 0
      %2006 = vmatpush.bf16.msra.mxu0 0
      %2007 = vmatpush.bf16.msra.mxu0 %v1924
      %2008 = vmatmul.bf16.gmra.mxu0 %v1919
      %v2009 = vpop.f32.mrf.mxu0
      %v2010 = vadd.f32 0.0, %v2009
      %v2011 = vpop.f32.mrf.mxu0
      %v2012 = vadd.f32 0.0, %v2011
      %2013 = vdwg.mxu0
      %2014 = vmatpush.bf16.msra.mxu0 0
      %2015 = vmatpush.bf16.msra.mxu0 0
      %2016 = vmatpush.bf16.msra.mxu0 0
      %2017 = vmatpush.bf16.msra.mxu0 0
      %2018 = vmatpush.bf16.msra.mxu0 0
      %2019 = vmatpush.bf16.msra.mxu0 0
      %2020 = vmatpush.bf16.msra.mxu0 0
      %2021 = vmatpush.bf16.msra.mxu0 %v1926
      %2022 = vmatmul.bf16.gmra.mxu0 %v1919
      %v2023 = vpop.f32.mrf.mxu0
      %v2024 = vadd.f32 0.0, %v2023
      %v2025 = vpop.f32.mrf.mxu0
      %v2026 = vadd.f32 0.0, %v2025
      %2027 = vdwg.mxu0
      %2028 = vmatpush.bf16.msra.mxu0 0
      %2029 = vmatpush.bf16.msra.mxu0 0
      %2030 = vmatpush.bf16.msra.mxu0 0
      %2031 = vmatpush.bf16.msra.mxu0 0
      %2032 = vmatpush.bf16.msra.mxu0 0
      %2033 = vmatpush.bf16.msra.mxu0 0
      %2034 = vmatpush.bf16.msra.mxu0 0
      %2035 = vmatpush.bf16.msra.mxu0 %v1928
      %2036 = vmatmul.bf16.gmra.mxu0 %v1919
      %v2037 = vpop.f32.mrf.mxu0
      %v2038 = vadd.f32 0.0, %v2037
      %v2039 = vpop.f32.mrf.mxu0
      %v2040 = vadd.f32 0.0, %v2039
      %2041 = vdwg.mxu0
      %2042 = vmatpush.bf16.msra.mxu0 0
      %2043 = vmatpush.bf16.msra.mxu0 0
      %2044 = vmatpush.bf16.msra.mxu0 0
      %2045 = vmatpush.bf16.msra.mxu0 0
      %2046 = vmatpush.bf16.msra.mxu0 0
      %2047 = vmatpush.bf16.msra.mxu0 0
      %2048 = vmatpush.bf16.msra.mxu0 0
      %2049 = vmatpush.bf16.msra.mxu0 %v1930
      %2050 = vmatmul.bf16.gmra.mxu0 %v1919
      %v2051 = vpop.f32.mrf.mxu0
      %v2052 = vadd.f32 0.0, %v2051
      %v2053 = vpop.f32.mrf.mxu0
      %v2054 = vadd.f32 0.0, %v2053
      %2055 = vdwg.mxu0
      %2056 = vmatpush.bf16.msra.mxu0 0
      %2057 = vmatpush.bf16.msra.mxu0 0
      %2058 = vmatpush.bf16.msra.mxu0 0
      %2059 = vmatpush.bf16.msra.mxu0 0
      %2060 = vmatpush.bf16.msra.mxu0 0
      %2061 = vmatpush.bf16.msra.mxu0 0
      %2062 = vmatpush.bf16.msra.mxu0 0
      %2063 = vmatpush.bf16.msra.mxu0 %v1932
      %2064 = vmatmul.bf16.gmra.mxu0 %v1919
      %v2065 = vpop.f32.mrf.mxu0
      %v2066 = vadd.f32 0.0, %v2065
      %v2067 = vpop.f32.mrf.mxu0
      %v2068 = vadd.f32 0.0, %v2067
      %2069 = vdwg.mxu0
      %2070 = vmatpush.bf16.msra.mxu0 0
      %2071 = vmatpush.bf16.msra.mxu0 0
      %2072 = vmatpush.bf16.msra.mxu0 0
      %2073 = vmatpush.bf16.msra.mxu0 0
      %2074 = vmatpush.bf16.msra.mxu0 0
      %2075 = vmatpush.bf16.msra.mxu0 0
      %2076 = vmatpush.bf16.msra.mxu0 0
      %2077 = vmatpush.bf16.msra.mxu0 %v1934
      %2078 = vmatmul.bf16.gmra.mxu0 %v1919
      %v2079 = vpop.f32.mrf.mxu0
      %v2080 = vadd.f32 0.0, %v2079
      %v2081 = vpop.f32.mrf.mxu0
      %v2082 = vadd.f32 0.0, %v2081
      %2083 = vdwg.mxu0
      %2084 = vmatpush.bf16.msra.mxu0 0
      %2085 = vmatpush.bf16.msra.mxu0 0
      %2086 = vmatpush.bf16.msra.mxu0 0
      %2087 = vmatpush.bf16.msra.mxu0 0
      %2088 = vmatpush.bf16.msra.mxu0 0
      %2089 = vmatpush.bf16.msra.mxu0 0
      %2090 = vmatpush.bf16.msra.mxu0 0
      %2091 = vmatpush.bf16.msra.mxu0 %v1936
      %2092 = vmatmul.bf16.gmra.mxu0 %v1919
      %v2093 = vpop.f32.mrf.mxu0
      %v2094 = vadd.f32 0.0, %v2093
      %v2095 = vpop.f32.mrf.mxu0
      %v2096 = vadd.f32 0.0, %v2095
      %2097 = vdwg.mxu0
      %2098 = vmatpush.bf16.msra.mxu0 0
      %2099 = vmatpush.bf16.msra.mxu0 0
      %2100 = vmatpush.bf16.msra.mxu0 0
      %2101 = vmatpush.bf16.msra.mxu0 0
      %2102 = vmatpush.bf16.msra.mxu0 0
      %2103 = vmatpush.bf16.msra.mxu0 0
      %2104 = vmatpush.bf16.msra.mxu0 0
      %2105 = vmatpush.bf16.msra.mxu0 %v1938
      %2106 = vmatmul.bf16.gmra.mxu0 %v1919
      %v2107 = vpop.f32.mrf.mxu0
      %v2108 = vadd.f32 0.0, %v2107
      %v2109 = vpop.f32.mrf.mxu0
      %v2110 = vadd.f32 0.0, %v2109
      %2111 = vdwg.mxu0
      %2112 = vmatpush.bf16.msra.mxu0 0
      %2113 = vmatpush.bf16.msra.mxu0 0
      %2114 = vmatpush.bf16.msra.mxu0 0
      %2115 = vmatpush.bf16.msra.mxu0 0
      %2116 = vmatpush.bf16.msra.mxu0 0
      %2117 = vmatpush.bf16.msra.mxu0 0
      %2118 = vmatpush.bf16.msra.mxu0 0
      %2119 = vmatpush.bf16.msra.mxu0 %v1940
      %2120 = vmatmul.bf16.gmra.mxu0 %v1919
      %v2121 = vpop.f32.mrf.mxu0
      %v2122 = vadd.f32 0.0, %v2121
      %v2123 = vpop.f32.mrf.mxu0
      %v2124 = vadd.f32 0.0, %v2123
      %2125 = vdwg.mxu0
      %2126 = vmatpush.bf16.msra.mxu0 0
      %2127 = vmatpush.bf16.msra.mxu0 0
      %2128 = vmatpush.bf16.msra.mxu0 0
      %2129 = vmatpush.bf16.msra.mxu0 0
      %2130 = vmatpush.bf16.msra.mxu0 0
      %2131 = vmatpush.bf16.msra.mxu0 0
      %2132 = vmatpush.bf16.msra.mxu0 0
      %2133 = vmatpush.bf16.msra.mxu0 %v1942
      %2134 = vmatmul.bf16.gmra.mxu0 %v1919
      %v2135 = vpop.f32.mrf.mxu0
      %v2136 = vadd.f32 0.0, %v2135
      %v2137 = vpop.f32.mrf.mxu0
      %v2138 = vadd.f32 0.0, %v2137
      %2139 = vdwg.mxu0
      %2140 = vmatpush.bf16.msra.mxu0 0
      %2141 = vmatpush.bf16.msra.mxu0 0
      %2142 = vmatpush.bf16.msra.mxu0 0
      %2143 = vmatpush.bf16.msra.mxu0 0
      %2144 = vmatpush.bf16.msra.mxu0 0
      %2145 = vmatpush.bf16.msra.mxu0 0
      %2146 = vmatpush.bf16.msra.mxu0 0
      %2147 = vmatpush.bf16.msra.mxu0 %v1944
      %2148 = vmatmul.bf16.gmra.mxu0 %v1919
      %v2149 = vpop.f32.mrf.mxu0
      %v2150 = vadd.f32 0.0, %v2149
      %v2151 = vpop.f32.mrf.mxu0
      %v2152 = vadd.f32 0.0, %v2151
      %2153 = vdwg.mxu0
      %2154 = vmatpush.bf16.msra.mxu0 0
      %2155 = vmatpush.bf16.msra.mxu0 0
      %2156 = vmatpush.bf16.msra.mxu0 0
      %2157 = vmatpush.bf16.msra.mxu0 0
      %2158 = vmatpush.bf16.msra.mxu0 0
      %2159 = vmatpush.bf16.msra.mxu0 0
      %2160 = vmatpush.bf16.msra.mxu0 0
      %2161 = vmatpush.bf16.msra.mxu0 %v1946
      %2162 = vmatmul.bf16.gmra.mxu0 %v1919
      %v2163 = vpop.f32.mrf.mxu0
      %v2164 = vadd.f32 0.0, %v2163
      %v2165 = vpop.f32.mrf.mxu0
      %v2166 = vadd.f32 0.0, %v2165
      %2167 = vdwg.mxu0
      %2168 = vmatpush.bf16.msra.mxu0 0
      %2169 = vmatpush.bf16.msra.mxu0 0
      %2170 = vmatpush.bf16.msra.mxu0 0
      %2171 = vmatpush.bf16.msra.mxu0 0
      %2172 = vmatpush.bf16.msra.mxu0 0
      %2173 = vmatpush.bf16.msra.mxu0 0
      %2174 = vmatpush.bf16.msra.mxu0 0
      %2175 = vmatpush.bf16.msra.mxu0 %v1948
      %2176 = vmatmul.bf16.gmra.mxu0 %v1919
      %v2177 = vpop.f32.mrf.mxu0
      %v2178 = vadd.f32 0.0, %v2177
      %v2179 = vpop.f32.mrf.mxu0
      %v2180 = vadd.f32 0.0, %v2179
      %2181 = vdwg.mxu0
      %2182 = vmatpush.bf16.msra.mxu0 0
      %2183 = vmatpush.bf16.msra.mxu0 0
      %2184 = vmatpush.bf16.msra.mxu0 0
      %2185 = vmatpush.bf16.msra.mxu0 0
      %2186 = vmatpush.bf16.msra.mxu0 0
      %2187 = vmatpush.bf16.msra.mxu0 0
      %2188 = vmatpush.bf16.msra.mxu0 0
      %2189 = vmatpush.bf16.msra.mxu0 %v1950
      %2190 = vmatmul.bf16.gmra.mxu0 %v1919
      %v2191 = vpop.f32.mrf.mxu0
      %v2192 = vadd.f32 0.0, %v2191
      %v2193 = vpop.f32.mrf.mxu0
      %v2194 = vadd.f32 0.0, %v2193
      %2195 = vdwg.mxu0
      %2196 = vmatpush.bf16.msra.mxu0 0
      %2197 = vmatpush.bf16.msra.mxu0 0
      %2198 = vmatpush.bf16.msra.mxu0 0
      %2199 = vmatpush.bf16.msra.mxu0 0
      %2200 = vmatpush.bf16.msra.mxu0 0
      %2201 = vmatpush.bf16.msra.mxu0 0
      %2202 = vmatpush.bf16.msra.mxu0 0
      %2203 = vmatpush.bf16.msra.mxu0 %v1952
      %2204 = vmatmul.bf16.gmra.mxu0 %v1919
      %v2205 = vpop.f32.mrf.mxu0
      %v2206 = vadd.f32 0.0, %v2205
      %v2207 = vpop.f32.mrf.mxu0
      %v2208 = vadd.f32 0.0, %v2207
      %2209 = vdwg.mxu0
      %2210 = vmatpush.bf16.msra.mxu0 0
      %2211 = vmatpush.bf16.msra.mxu0 0
      %2212 = vmatpush.bf16.msra.mxu0 0
      %2213 = vmatpush.bf16.msra.mxu0 0
      %2214 = vmatpush.bf16.msra.mxu0 0
      %2215 = vmatpush.bf16.msra.mxu0 0
      %2216 = vmatpush.bf16.msra.mxu0 0
      %2217 = vmatpush.bf16.msra.mxu0 %v1954
      %2218 = vmatmul.bf16.gmra.mxu0 %v1919
      %v2219 = vpop.f32.mrf.mxu0
      %v2220 = vadd.f32 0.0, %v2219
      %v2221 = vpop.f32.mrf.mxu0
      %v2222 = vadd.f32 0.0, %v2221
      %2223 = vdwg.mxu0
      %2224 = vmatpush.bf16.msra.mxu0 0
      %2225 = vmatpush.bf16.msra.mxu0 0
      %2226 = vmatpush.bf16.msra.mxu0 0
      %2227 = vmatpush.bf16.msra.mxu0 0
      %2228 = vmatpush.bf16.msra.mxu0 0
      %2229 = vmatpush.bf16.msra.mxu0 0
      %2230 = vmatpush.bf16.msra.mxu0 0
      %2231 = vmatpush.bf16.msra.mxu0 %v1956
      %2232 = vmatmul.bf16.gmra.mxu0 %v1919
      %v2233 = vpop.f32.mrf.mxu0
      %v2234 = vadd.f32 0.0, %v2233
      %v2235 = vpop.f32.mrf.mxu0
      %v2236 = vadd.f32 0.0, %v2235
      %2237 = vdwg.mxu0
      %2238 = vmatpush.bf16.msra.mxu0 0
      %2239 = vmatpush.bf16.msra.mxu0 0
      %2240 = vmatpush.bf16.msra.mxu0 0
      %2241 = vmatpush.bf16.msra.mxu0 0
      %2242 = vmatpush.bf16.msra.mxu0 0
      %2243 = vmatpush.bf16.msra.mxu0 0
      %2244 = vmatpush.bf16.msra.mxu0 0
      %2245 = vmatpush.bf16.msra.mxu0 %v1958
      %2246 = vmatmul.bf16.gmra.mxu0 %v1919
      %v2247 = vpop.f32.mrf.mxu0
      %v2248 = vadd.f32 0.0, %v2247
      %v2249 = vpop.f32.mrf.mxu0
      %v2250 = vadd.f32 0.0, %v2249
      %2251 = vdwg.mxu0
      %2252 = vmatpush.bf16.msra.mxu0 0
      %2253 = vmatpush.bf16.msra.mxu0 0
      %2254 = vmatpush.bf16.msra.mxu0 0
      %2255 = vmatpush.bf16.msra.mxu0 0
      %2256 = vmatpush.bf16.msra.mxu0 0
      %2257 = vmatpush.bf16.msra.mxu0 0
      %2258 = vmatpush.bf16.msra.mxu0 0
      %2259 = vmatpush.bf16.msra.mxu0 %v1960
      %2260 = vmatmul.bf16.gmra.mxu0 %v1919
      %v2261 = vpop.f32.mrf.mxu0
      %v2262 = vadd.f32 0.0, %v2261
      %v2263 = vpop.f32.mrf.mxu0
      %v2264 = vadd.f32 0.0, %v2263
      %2265 = vdwg.mxu0
      %2266 = vmatpush.bf16.msra.mxu0 0
      %2267 = vmatpush.bf16.msra.mxu0 0
      %2268 = vmatpush.bf16.msra.mxu0 0
      %2269 = vmatpush.bf16.msra.mxu0 0
      %2270 = vmatpush.bf16.msra.mxu0 0
      %2271 = vmatpush.bf16.msra.mxu0 0
      %2272 = vmatpush.bf16.msra.mxu0 0
      %2273 = vmatpush.bf16.msra.mxu0 %v1962
      %2274 = vmatmul.bf16.gmra.mxu0 %v1919
      %v2275 = vpop.f32.mrf.mxu0
      %v2276 = vadd.f32 0.0, %v2275
      %v2277 = vpop.f32.mrf.mxu0
      %v2278 = vadd.f32 0.0, %v2277
      %2279 = vdwg.mxu0
      %2280 = vmatpush.bf16.msra.mxu0 0
      %2281 = vmatpush.bf16.msra.mxu0 0
      %2282 = vmatpush.bf16.msra.mxu0 0
      %2283 = vmatpush.bf16.msra.mxu0 0
      %2284 = vmatpush.bf16.msra.mxu0 0
      %2285 = vmatpush.bf16.msra.mxu0 0
      %2286 = vmatpush.bf16.msra.mxu0 0
      %2287 = vmatpush.bf16.msra.mxu0 %v1964
      %2288 = vmatmul.bf16.gmra.mxu0 %v1919
      %v2289 = vpop.f32.mrf.mxu0
      %v2290 = vadd.f32 0.0, %v2289
      %v2291 = vpop.f32.mrf.mxu0
      %v2292 = vadd.f32 0.0, %v2291
      %2293 = vdwg.mxu0
      %2294 = vmatpush.bf16.msra.mxu0 0
      %2295 = vmatpush.bf16.msra.mxu0 0
      %2296 = vmatpush.bf16.msra.mxu0 0
      %2297 = vmatpush.bf16.msra.mxu0 0
      %2298 = vmatpush.bf16.msra.mxu0 0
      %2299 = vmatpush.bf16.msra.mxu0 0
      %2300 = vmatpush.bf16.msra.mxu0 0
      %2301 = vmatpush.bf16.msra.mxu0 %v1966
      %2302 = vmatmul.bf16.gmra.mxu0 %v1919
      %v2303 = vpop.f32.mrf.mxu0
      %v2304 = vadd.f32 0.0, %v2303
      %v2305 = vpop.f32.mrf.mxu0
      %v2306 = vadd.f32 0.0, %v2305
      %2307 = vdwg.mxu0
      %2308 = vmatpush.bf16.msra.mxu0 0
      %2309 = vmatpush.bf16.msra.mxu0 0
      %2310 = vmatpush.bf16.msra.mxu0 0
      %2311 = vmatpush.bf16.msra.mxu0 0
      %2312 = vmatpush.bf16.msra.mxu0 0
      %2313 = vmatpush.bf16.msra.mxu0 0
      %2314 = vmatpush.bf16.msra.mxu0 0
      %2315 = vmatpush.bf16.msra.mxu0 %v1968
      %2316 = vmatmul.bf16.gmra.mxu0 %v1919
      %v2317 = vpop.f32.mrf.mxu0
      %v2318 = vadd.f32 0.0, %v2317
      %v2319 = vpop.f32.mrf.mxu0
      %v2320 = vadd.f32 0.0, %v2319
      %2321 = vdwg.mxu0
      %2322 = vmatpush.bf16.msra.mxu0 0
      %2323 = vmatpush.bf16.msra.mxu0 0
      %2324 = vmatpush.bf16.msra.mxu0 0
      %2325 = vmatpush.bf16.msra.mxu0 0
      %2326 = vmatpush.bf16.msra.mxu0 0
      %2327 = vmatpush.bf16.msra.mxu0 0
      %2328 = vmatpush.bf16.msra.mxu0 0
      %2329 = vmatpush.bf16.msra.mxu0 %v1970
      %2330 = vmatmul.bf16.gmra.mxu0 %v1919
      %v2331 = vpop.f32.mrf.mxu0
      %v2332 = vadd.f32 0.0, %v2331
      %v2333 = vpop.f32.mrf.mxu0
      %v2334 = vadd.f32 0.0, %v2333
      %2335 = vdwg.mxu0
      %2336 = vmatpush.bf16.msra.mxu0 0
      %2337 = vmatpush.bf16.msra.mxu0 0
      %2338 = vmatpush.bf16.msra.mxu0 0
      %2339 = vmatpush.bf16.msra.mxu0 0
      %2340 = vmatpush.bf16.msra.mxu0 0
      %2341 = vmatpush.bf16.msra.mxu0 0
      %2342 = vmatpush.bf16.msra.mxu0 0
      %2343 = vmatpush.bf16.msra.mxu0 %v1972
      %2344 = vmatmul.bf16.gmra.mxu0 %v1919
      %v2345 = vpop.f32.mrf.mxu0
      %v2346 = vadd.f32 0.0, %v2345
      %v2347 = vpop.f32.mrf.mxu0
      %v2348 = vadd.f32 0.0, %v2347
      %2349 = vdwg.mxu0
      %2350 = vmatpush.bf16.msra.mxu0 0
      %2351 = vmatpush.bf16.msra.mxu0 0
      %2352 = vmatpush.bf16.msra.mxu0 0
      %2353 = vmatpush.bf16.msra.mxu0 0
      %2354 = vmatpush.bf16.msra.mxu0 0
      %2355 = vmatpush.bf16.msra.mxu0 0
      %2356 = vmatpush.bf16.msra.mxu0 0
      %2357 = vmatpush.bf16.msra.mxu0 %v1974
      %2358 = vmatmul.bf16.gmra.mxu0 %v1919
      %v2359 = vpop.f32.mrf.mxu0
      %v2360 = vadd.f32 0.0, %v2359
      %v2361 = vpop.f32.mrf.mxu0
      %v2362 = vadd.f32 0.0, %v2361
      %2363 = vdwg.mxu0
      %2364 = vmatpush.bf16.msra.mxu0 0
      %2365 = vmatpush.bf16.msra.mxu0 0
      %2366 = vmatpush.bf16.msra.mxu0 0
      %2367 = vmatpush.bf16.msra.mxu0 0
      %2368 = vmatpush.bf16.msra.mxu0 0
      %2369 = vmatpush.bf16.msra.mxu0 0
      %2370 = vmatpush.bf16.msra.mxu0 0
      %2371 = vmatpush.bf16.msra.mxu0 %v1976
      %2372 = vmatmul.bf16.gmra.mxu0 %v1919
      %v2373 = vpop.f32.mrf.mxu0
      %v2374 = vadd.f32 0.0, %v2373
      %v2375 = vpop.f32.mrf.mxu0
      %v2376 = vadd.f32 0.0, %v2375
      %2377 = vdwg.mxu0
      %2378 = vmatpush.bf16.msra.mxu0 0
      %2379 = vmatpush.bf16.msra.mxu0 0
      %2380 = vmatpush.bf16.msra.mxu0 0
      %2381 = vmatpush.bf16.msra.mxu0 0
      %2382 = vmatpush.bf16.msra.mxu0 0
      %2383 = vmatpush.bf16.msra.mxu0 0
      %2384 = vmatpush.bf16.msra.mxu0 0
      %2385 = vmatpush.bf16.msra.mxu0 %v1978
      %2386 = vmatmul.bf16.gmra.mxu0 %v1919
      %v2387 = vpop.f32.mrf.mxu0
      %v2388 = vadd.f32 0.0, %v2387
      %v2389 = vpop.f32.mrf.mxu0
      %v2390 = vadd.f32 0.0, %v2389
      %2391 = vdwg.mxu0
      %2392 = vmatpush.bf16.msra.mxu0 0
      %2393 = vmatpush.bf16.msra.mxu0 0
      %2394 = vmatpush.bf16.msra.mxu0 0
      %2395 = vmatpush.bf16.msra.mxu0 0
      %2396 = vmatpush.bf16.msra.mxu0 0
      %2397 = vmatpush.bf16.msra.mxu0 0
      %2398 = vmatpush.bf16.msra.mxu0 0
      %2399 = vmatpush.bf16.msra.mxu0 %v1980
      %2400 = vmatmul.bf16.gmra.mxu0 %v1919
      %v2401 = vpop.f32.mrf.mxu0
      %v2402 = vadd.f32 0.0, %v2401
      %v2403 = vpop.f32.mrf.mxu0
      %v2404 = vadd.f32 0.0, %v2403
      %2405 = vdwg.mxu0
      %2406 = vmatpush.bf16.msra.mxu0 0
      %2407 = vmatpush.bf16.msra.mxu0 0
      %2408 = vmatpush.bf16.msra.mxu0 0
      %2409 = vmatpush.bf16.msra.mxu0 0
      %2410 = vmatpush.bf16.msra.mxu0 0
      %2411 = vmatpush.bf16.msra.mxu0 0
      %2412 = vmatpush.bf16.msra.mxu0 0
      %2413 = vmatpush.bf16.msra.mxu0 %v1982
      %2414 = vmatmul.bf16.gmra.mxu0 %v1919
      %v2415 = vpop.f32.mrf.mxu0
      %v2416 = vadd.f32 0.0, %v2415
      %v2417 = vpop.f32.mrf.mxu0
      %v2418 = vadd.f32 0.0, %v2417
      %2419 = vdwg.mxu0
      %2420 = vmatpush.bf16.msra.mxu0 0
      %2421 = vmatpush.bf16.msra.mxu0 0
      %2422 = vmatpush.bf16.msra.mxu0 0
      %2423 = vmatpush.bf16.msra.mxu0 0
      %2424 = vmatpush.bf16.msra.mxu0 0
      %2425 = vmatpush.bf16.msra.mxu0 0
      %2426 = vmatpush.bf16.msra.mxu0 0
      %2427 = vmatpush.bf16.msra.mxu0 %v1984
      %2428 = vmatmul.bf16.gmra.mxu0 %v1919
      %v2429 = vpop.f32.mrf.mxu0
      %v2430 = vadd.f32 0.0, %v2429
      %v2431 = vpop.f32.mrf.mxu0
      %v2432 = vadd.f32 0.0, %v2431
      %2433 = vdwg.mxu0
      %2434 = vst [vmem:[%s241] sm:$0xff] %v1996
      %2435 = vst [vmem:[%s241 + $0x8] sm:$0xff] %v2010
      %2436 = vst [vmem:[%s241 + $0x10] sm:$0xff] %v2024
      %2437 = vst [vmem:[%s241 + $0x18] sm:$0xff] %v2038
      %2438 = vst [vmem:[%s241 + $0x20] sm:$0xff] %v2052
      %2439 = vst [vmem:[%s241 + $0x28] sm:$0xff] %v2066
      %2440 = vst [vmem:[%s241 + $0x30] sm:$0xff] %v2080
      %2441 = vst [vmem:[%s241 + $0x38] sm:$0xff] %v2094
      %2442 = vst [vmem:[%s241 + $0x40] sm:$0xff] %v2108
      %2443 = vst [vmem:[%s241 + $0x48] sm:$0xff] %v2122
      %2444 = vst [vmem:[%s241 + $0x50] sm:$0xff] %v2136
      %2445 = vst [vmem:[%s241 + $0x58] sm:$0xff] %v2150
      %2446 = vst [vmem:[%s241 + $0x60] sm:$0xff] %v2164
      %2447 = vst [vmem:[%s241 + $0x68] sm:$0xff] %v2178
      %2448 = vst [vmem:[%s241 + $0x70] sm:$0xff] %v2192
      %2449 = vst [vmem:[%s241 + $0x78] sm:$0xff] %v2206
      %2450 = vst [vmem:[%s241 + $0x80] sm:$0xff] %v2220
      %2451 = vst [vmem:[%s241 + $0x88] sm:$0xff] %v2234
      %2452 = vst [vmem:[%s241 + $0x90] sm:$0xff] %v2248
      %2453 = vst [vmem:[%s241 + $0x98] sm:$0xff] %v2262
      %2454 = vst [vmem:[%s241 + $0xa0] sm:$0xff] %v2276
      %2455 = vst [vmem:[%s241 + $0xa8] sm:$0xff] %v2290
      %2456 = vst [vmem:[%s241 + $0xb0] sm:$0xff] %v2304
      %2457 = vst [vmem:[%s241 + $0xb8] sm:$0xff] %v2318
      %2458 = vst [vmem:[%s241 + $0xc0] sm:$0xff] %v2332
      %2459 = vst [vmem:[%s241 + $0xc8] sm:$0xff] %v2346
      %2460 = vst [vmem:[%s241 + $0xd0] sm:$0xff] %v2360
      %2461 = vst [vmem:[%s241 + $0xd8] sm:$0xff] %v2374
      %2462 = vst [vmem:[%s241 + $0xe0] sm:$0xff] %v2388
      %2463 = vst [vmem:[%s241 + $0xe8] sm:$0xff] %v2402
      %2464 = vst [vmem:[%s241 + $0xf0] sm:$0xff] %v2416
      %2465 = vst [vmem:[%s241 + $0xf8] sm:$0xff] %v2430
      %2466 = vst [vmem:[%s241 + $0x100] sm:$0xff] %v1998
      %2467 = vst [vmem:[%s241 + $0x108] sm:$0xff] %v2012
      %2468 = vst [vmem:[%s241 + $0x110] sm:$0xff] %v2026
      %2469 = vst [vmem:[%s241 + $0x118] sm:$0xff] %v2040
      %2470 = vst [vmem:[%s241 + $0x120] sm:$0xff] %v2054
      %2471 = vst [vmem:[%s241 + $0x128] sm:$0xff] %v2068
      %2472 = vst [vmem:[%s241 + $0x130] sm:$0xff] %v2082
      %2473 = vst [vmem:[%s241 + $0x138] sm:$0xff] %v2096
      %2474 = vst [vmem:[%s241 + $0x140] sm:$0xff] %v2110
      %2475 = vst [vmem:[%s241 + $0x148] sm:$0xff] %v2124
      %2476 = vst [vmem:[%s241 + $0x150] sm:$0xff] %v2138
      %2477 = vst [vmem:[%s241 + $0x158] sm:$0xff] %v2152
      %2478 = vst [vmem:[%s241 + $0x160] sm:$0xff] %v2166
      %2479 = vst [vmem:[%s241 + $0x168] sm:$0xff] %v2180
      %2480 = vst [vmem:[%s241 + $0x170] sm:$0xff] %v2194
      %2481 = vst [vmem:[%s241 + $0x178] sm:$0xff] %v2208
      %2482 = vst [vmem:[%s241 + $0x180] sm:$0xff] %v2222
      %2483 = vst [vmem:[%s241 + $0x188] sm:$0xff] %v2236
      %2484 = vst [vmem:[%s241 + $0x190] sm:$0xff] %v2250
      %2485 = vst [vmem:[%s241 + $0x198] sm:$0xff] %v2264
      %2486 = vst [vmem:[%s241 + $0x1a0] sm:$0xff] %v2278
      %2487 = vst [vmem:[%s241 + $0x1a8] sm:$0xff] %v2292
      %2488 = vst [vmem:[%s241 + $0x1b0] sm:$0xff] %v2306
      %2489 = vst [vmem:[%s241 + $0x1b8] sm:$0xff] %v2320
      %2490 = vst [vmem:[%s241 + $0x1c0] sm:$0xff] %v2334
      %2491 = vst [vmem:[%s241 + $0x1c8] sm:$0xff] %v2348
      %2492 = vst [vmem:[%s241 + $0x1d0] sm:$0xff] %v2362
      %2493 = vst [vmem:[%s241 + $0x1d8] sm:$0xff] %v2376
      %2494 = vst [vmem:[%s241 + $0x1e0] sm:$0xff] %v2390
      %2495 = vst [vmem:[%s241 + $0x1e8] sm:$0xff] %v2404
      %2496 = vst [vmem:[%s241 + $0x1f0] sm:$0xff] %v2418
      %2497 = vst [vmem:[%s241 + $0x1f8] sm:$0xff] %v2432
      %s2498 = smul.u32 32, %s20
      %p2499 = scmp.lt.s32.totalorder %s19, 1
      %s2500 = scalar_select %p2499, %s19, 1
      %p2501 = scmp.lt.s32.totalorder %s2498, 31
      %s2502 = scalar_select %p2501, %s2498, 31
      %s2503 = smul.addr %s2500, 64
      %s2504 = sadd.s32 %s2502, %s2503
      %s2505 = smul.addr %s2504, 8
      %s2506 = scalar_lea.vmem %s4, %s2505
      // Predicated region
      $region41: #{upsample_forward.1} parent=35 // pred_check
        %p2507 = pneg %p141
      $region42: #{upsample_forward.1} parent=35 // pred_check_branch
        %2509 = sbr.rel (%p2507) target = $region44
      $region43: #{upsample_forward.1} parent=35 // pred_region
        %s2510 = smul.u32 32, %s20
      $region44: #{upsample_forward.1} parent=35 // pred_fallthru
        _
    $region36: #{upsample_forward.1} parent=5 // pred_fallthru
      _
    %p2511 = scmp.le.s32.totalorder 2, %s10
    // Predicated region
    $region45: #{upsample_forward.1} parent=5 // pred_check
      %p2512 = pneg %p2511
    $region46: #{upsample_forward.1} parent=5 // pred_check_branch
      %2514 = sbr.rel (%p2512) target = $region48
    $region47: #{upsample_forward.1} parent=5 // pred_region
      %s2515 = ssub.s32 %s10, 2
      // Predicated region
      $region49: #{upsample_forward.1} parent=47 // pred_check
        %p2516 = pneg %p147
      $region50: #{upsample_forward.1} parent=47 // pred_check_branch
        %2518 = sbr.rel (%p2516) target = $region52
      $region51: #{upsample_forward.1} parent=47 // pred_region
        %s2519 = smul.u32 32, %s22
        %p2520 = scmp.lt.s32.totalorder %s21, 1
        %s2521 = scalar_select %p2520, %s21, 1
        %p2522 = scmp.lt.s32.totalorder %s2519, 31
        %s2523 = scalar_select %p2522, %s2519, 31
        %s2524 = smul.addr %s2521, 64
        %s2525 = sadd.s32 %s2523, %s2524
        %s2526 = smul.addr %s2525, 8
        %s2527 = scalar_lea.vmem %s4, %s2526
      $region52: #{upsample_forward.1} parent=47 // pred_fallthru
        _
    $region48: #{upsample_forward.1} parent=5 // pred_fallthru
      _
  $region6: #{upsample_forward.1} parent=0 // loop_footer
    %s14 = sadd.s32 1, %s10
  $region7: #{upsample_forward.1} parent=0 // loop_footer_branch
    %9 = sbr.rel target = $region3
  $region8: #{upsample_forward.1} parent=0 // loop_exit
    _

</llo_original>
